<compile_context>
chip_gen: v5e
topology: v5e:2x2
jax: 0.10.0
libtpu: 0.0.40
codegen_flags: <defaults>
</compile_context>

<pallas_src>
import functools

import jax
import jax.numpy as jnp
from jax import lax
from jax.experimental import pallas as pl
from jax.experimental.pallas import tpu as pltpu


# ----------------------------- fused kernel ----------------------------------
def fused_kernel(xz_ref, wir_ref, wiz_ref, win_ref,
                 whr_ref, whz_ref, whn_ref,
                 br_ref, bz_ref, bin_ref, bhn_ref,
                 w1x_ref, w1z_ref, b1_ref,
                 wres_ref, bres_ref, ratio_ref,
                 out_ref,
                 gir_s, giz_s, gin_s,
                 *, P, B, rw):
    # xz_ref:  (P*2B, m)  flattened time-major [x;z] batch-concat sequence
    #          row index = t*2B + b  (b < B -> x series, b >= B -> z series)
    # wi*_ref: (m, H)   per-gate input weights (transposed)
    # wh*_ref: (H, H)   per-gate recurrent weights (transposed)
    # br/bz:   (1, H)   combined b_ih + b_hh for r/z gates
    # bin/bhn: (1, H)   separate n-gate biases (b_hh_n must stay inside the r-gated term)
    # w1x/w1z: (H, m)   split linear1 weights (transposed); b1: (1, m)
    # wres:    (rw,)  SMEM ; bres: (1,) SMEM ; ratio: (1,) SMEM
    # out_ref: (B, m)
    # gi*_s:   (P*2B, H) VMEM scratch for the hoisted input projections
    B2 = 2 * B
    H = whr_ref.shape[0]

    # ---- prologue: hoisted input projections (one big MXU matmul per gate) ----
    x_all = xz_ref[...]                                              # (P*B2, m)
    gir_s[...] = jnp.dot(x_all, wir_ref[...],
                         preferred_element_type=jnp.float32) + br_ref[...]
    giz_s[...] = jnp.dot(x_all, wiz_ref[...],
                         preferred_element_type=jnp.float32) + bz_ref[...]
    gin_s[...] = jnp.dot(x_all, win_ref[...],
                         preferred_element_type=jnp.float32) + bin_ref[...]

    # hoisted loads / broadcasts (JAX does not CSE these inside the loop)
    whr = whr_ref[...]
    whz = whz_ref[...]
    whn = whn_ref[...]
    bhn = jnp.broadcast_to(bhn_ref[...], (B2, H))

    # ---- serial GRU recurrence over P steps (x and z batched together) ----
    def step(t, h):
        row = pl.multiple_of(t * B2, B2)
        gi_r = gir_s[pl.ds(row, B2), :]
        gi_z = giz_s[pl.ds(row, B2), :]
        gi_n = gin_s[pl.ds(row, B2), :]
        rg = jax.nn.sigmoid(gi_r + jnp.dot(h, whr, preferred_element_type=jnp.float32))
        zg = jax.nn.sigmoid(gi_z + jnp.dot(h, whz, preferred_element_type=jnp.float32))
        ng = jnp.tanh(gi_n + rg * (jnp.dot(h, whn, preferred_element_type=jnp.float32) + bhn))
        return (1.0 - zg) * ng + zg * h

    h0 = jnp.zeros((B2, H), jnp.float32)
    h = lax.fori_loop(0, P, step, h0, unroll=True)

    # ---- fused head: linear1 (split weights, no concat) + residual + sigmoid ----
    h_x = h[:B]                                                      # hidden for x sequences
    h_z = h[B:]                                                      # hidden for z sequences
    res = (jnp.dot(h_x, w1x_ref[...], preferred_element_type=jnp.float32)
           + jnp.dot(h_z, w1z_ref[...], preferred_element_type=jnp.float32)
           + b1_ref[...])                                            # (B, m)

    # residual Linear(rw -> 1) over the last rw steps of x (static slices, rw small)
    zacc = jnp.zeros_like(res)
    for k in range(rw):
        row0 = (P - rw + k) * B2
        zacc = zacc + wres_ref[k] * xz_ref[row0:row0 + B, :]
    zacc = zacc + bres_ref[0]

    out_ref[...] = jax.nn.sigmoid(res * ratio_ref[0] + zacc)


# ----------------------------- full forward ----------------------------------
def model_forward(params, x, z, *, ratio, residual_window):
    # x, z: (B, P, m) batch-first (as in the PyTorch forward)
    # params are in PyTorch layout:
    #   w_ih (3H, m), w_hh (3H, H), b_ih (3H,), b_hh (3H,)   gate order (r, z, n)
    #   w1 (m, 2H), b1 (m,)   ;   w_res (1, rw), b_res (1,)
    B, P, m = x.shape
    H = params["w_hh"].shape[1]
    rw = min(residual_window, P)
    B2 = 2 * B

    w_ih = params["w_ih"].astype(jnp.float32)
    w_hh = params["w_hh"].astype(jnp.float32)
    b_ih = params["b_ih"].astype(jnp.float32)
    b_hh = params["b_hh"].astype(jnp.float32)

    wir, wiz, win = w_ih[:H].T, w_ih[H:2 * H].T, w_ih[2 * H:].T      # (m, H) each
    whr, whz, whn = w_hh[:H].T, w_hh[H:2 * H].T, w_hh[2 * H:].T      # (H, H) each
    b_r = (b_ih[:H] + b_hh[:H]).reshape(1, H)                        # legal to combine (r gate)
    b_z = (b_ih[H:2 * H] + b_hh[H:2 * H]).reshape(1, H)              # legal to combine (z gate)
    b_in = b_ih[2 * H:].reshape(1, H)                                # n gate: keep separate
    b_hn = b_hh[2 * H:].reshape(1, H)

    w1 = params["w1"].astype(jnp.float32)                            # (m, 2H)
    w1x_t, w1z_t = w1[:, :H].T, w1[:, H:].T                          # (H, m) each
    b1 = params["b1"].astype(jnp.float32).reshape(1, m)

    w_res = params["w_res"].astype(jnp.float32).reshape(rw)
    b_res = params["b_res"].astype(jnp.float32).reshape(1)
    ratio_arr = jnp.asarray([ratio], jnp.float32)

    # single recurrence over both sequences: batch-concat, time-major, flattened rows
    xz = jnp.concatenate([x, z], axis=0).astype(jnp.float32)         # (2B, P, m)
    xz_flat = jnp.transpose(xz, (1, 0, 2)).reshape(P * B2, m)        # (P*2B, m)

    vmem = pl.BlockSpec(memory_space=pltpu.MemorySpace.VMEM)
    smem = pl.BlockSpec(memory_space=pltpu.MemorySpace.SMEM)
    kernel = functools.partial(fused_kernel, P=P, B=B, rw=rw)

    return pl.pallas_call(
        kernel,
        out_shape=jax.ShapeDtypeStruct((B, m), jnp.float32),
        in_specs=[vmem] * 14 + [smem] * 3,
        out_specs=vmem,
        scratch_shapes=[
            pltpu.VMEM((P * B2, H), jnp.float32),
            pltpu.VMEM((P * B2, H), jnp.float32),
            pltpu.VMEM((P * B2, H), jnp.float32),
        ],
    )(xz_flat, wir, wiz, win, whr, whz, whn,
      b_r, b_z, b_in, b_hn, w1x_t, w1z_t, b1,
      w_res, b_res, ratio_arr)


# ----------------------------- pure-JAX reference ----------------------------
def ref_forward(params, x, z, *, ratio, residual_window):
    H = params["w_hh"].shape[1]
    w_ih_t = params["w_ih"].T
    w_hh_t = params["w_hh"].T
    b_ih, b_hh = params["b_ih"], params["b_hh"]

    def gru(seq_bpm):
        seq = jnp.transpose(seq_bpm, (1, 0, 2)).astype(jnp.float32)
        h = jnp.zeros((seq.shape[1], H), jnp.float32)
        for t in range(seq.shape[0]):
            gi = seq[t] @ w_ih_t + b_ih
            gh = h @ w_hh_t + b_hh
            i_r, i_z, i_n = gi[:, :H], gi[:, H:2 * H], gi[:, 2 * H:]
            h_r, h_z, h_n = gh[:, :H], gh[:, H:2 * H], gh[:, 2 * H:]
            rg = jax.nn.sigmoid(i_r + h_r)
            zg = jax.nn.sigmoid(i_z + h_z)
            ng = jnp.tanh(i_n + rg * h_n)
            h = (1.0 - zg) * ng + zg * h
        return h

    r = gru(x)
    s = gru(z)
    res = jnp.concatenate([r, s], -1) @ params["w1"].T + params["b1"]
    rw = residual_window
    xt = x[:, -rw:, :].astype(jnp.float32)                            # (B, rw, m)
    zres = jnp.einsum("brm,r->bm", xt, params["w_res"].reshape(rw)) + params["b_res"].reshape(1)[0]
    return jax.nn.sigmoid(res * ratio + zres)


# ----------------------------- main ------------------------------------------
if __name__ == "__main__":
    B, P, m, H, rw = 2, 8, 16, 32, 4
    ratio = 0.5

    key = jax.random.PRNGKey(0)
    ks = jax.random.split(key, 9)
    scale = 0.1
    params = {
        "w_ih":  scale * jax.random.normal(ks[0], (3 * H, m), jnp.float32),
        "w_hh":  scale * jax.random.normal(ks[1], (3 * H, H), jnp.float32),
        "b_ih":  scale * jax.random.normal(ks[2], (3 * H,), jnp.float32),
        "b_hh":  scale * jax.random.normal(ks[3], (3 * H,), jnp.float32),
        "w1":    scale * jax.random.normal(ks[4], (m, 2 * H), jnp.float32),
        "b1":    scale * jax.random.normal(ks[5], (m,), jnp.float32),
        "w_res": scale * jax.random.normal(ks[6], (1, rw), jnp.float32),
        "b_res": scale * jax.random.normal(ks[7], (1,), jnp.float32),
    }

    kx, kz = jax.random.split(ks[8])
    x = jax.random.normal(kx, (B, P, m), jnp.float32)
    z = jax.random.normal(kz, (B, P, m), jnp.float32)

    out = model_forward(params, x, z, ratio=ratio, residual_window=rw)
    out = jax.block_until_ready(out)

    ref = ref_forward(params, x, z, ratio=ratio, residual_window=rw)
    assert out.shape == (B, m)
    assert jnp.allclose(out, ref, atol=1e-4, rtol=1e-4), "kernel output mismatch vs reference"

    print("KERNEL_OK")
</pallas_src>

<mosaic_0001>
module attributes {stable_mosaic.version = 11 : i64} {
  func.func @fused_kernel(%arg0: memref<32x16xf32, #tpu.memory_space<vmem>>, %arg1: memref<16x32xf32, #tpu.memory_space<vmem>>, %arg2: memref<16x32xf32, #tpu.memory_space<vmem>>, %arg3: memref<16x32xf32, #tpu.memory_space<vmem>>, %arg4: memref<32x32xf32, #tpu.memory_space<vmem>>, %arg5: memref<32x32xf32, #tpu.memory_space<vmem>>, %arg6: memref<32x32xf32, #tpu.memory_space<vmem>>, %arg7: memref<1x32xf32, #tpu.memory_space<vmem>>, %arg8: memref<1x32xf32, #tpu.memory_space<vmem>>, %arg9: memref<1x32xf32, #tpu.memory_space<vmem>>, %arg10: memref<1x32xf32, #tpu.memory_space<vmem>>, %arg11: memref<32x16xf32, #tpu.memory_space<vmem>>, %arg12: memref<32x16xf32, #tpu.memory_space<vmem>>, %arg13: memref<1x16xf32, #tpu.memory_space<vmem>>, %arg14: memref<4xf32, #tpu.memory_space<smem>>, %arg15: memref<1xf32, #tpu.memory_space<smem>>, %arg16: memref<1xf32, #tpu.memory_space<smem>>, %arg17: memref<2x16xf32, #tpu.memory_space<vmem>>, %arg18: memref<32x32xf32, #tpu.memory_space<vmem>>, %arg19: memref<32x32xf32, #tpu.memory_space<vmem>>, %arg20: memref<32x32xf32, #tpu.memory_space<vmem>>) attributes {dimension_semantics = [], scalar_prefetch = 0 : i64, scratch_operands = 3 : i64, tpu.core_type = #tpu.core_type<tc>} {
    %c0 = arith.constant 0 : index
    %c0_0 = arith.constant 0 : index
    %0 = vector.load %arg0[%c0, %c0_0] : memref<32x16xf32, #tpu.memory_space<vmem>>, vector<32x16xf32>
    %c0_1 = arith.constant 0 : index
    %c0_2 = arith.constant 0 : index
    %1 = vector.load %arg1[%c0_1, %c0_2] : memref<16x32xf32, #tpu.memory_space<vmem>>, vector<16x32xf32>
    %cst = arith.constant dense<0.000000e+00> : vector<32x32xf32>
    %2 = tpu.matmul %0, %1, %cst {dimension_numbers = #tpu.dot_dimension_numbers<[1], [0], [0], [1], [0, 0, 1, 1], [], []>} : vector<32x16xf32>, vector<16x32xf32>, vector<32x32xf32> -> vector<32x32xf32>
    %c0_3 = arith.constant 0 : index
    %c0_4 = arith.constant 0 : index
    %3 = vector.load %arg7[%c0_3, %c0_4] : memref<1x32xf32, #tpu.memory_space<vmem>>, vector<1x32xf32>
    %4 = vector.broadcast %3 : vector<1x32xf32> to vector<32x32xf32>
    %5 = arith.addf %2, %4 : vector<32x32xf32>
    %c0_5 = arith.constant 0 : index
    %c0_6 = arith.constant 0 : index
    %6 = vector.load %arg18[%c0_5, %c0_6] : memref<32x32xf32, #tpu.memory_space<vmem>>, vector<32x32xf32>
    tpu.vector_store %arg18[%c0_5, %c0_6], %5 {strides = array<i32>} : memref<32x32xf32, #tpu.memory_space<vmem>>, vector<32x32xf32>,
    %c0_7 = arith.constant 0 : index
    %c0_8 = arith.constant 0 : index
    %7 = vector.load %arg2[%c0_7, %c0_8] : memref<16x32xf32, #tpu.memory_space<vmem>>, vector<16x32xf32>
    %cst_9 = arith.constant dense<0.000000e+00> : vector<32x32xf32>
    %8 = tpu.matmul %0, %7, %cst_9 {dimension_numbers = #tpu.dot_dimension_numbers<[1], [0], [0], [1], [0, 0, 1, 1], [], []>} : vector<32x16xf32>, vector<16x32xf32>, vector<32x32xf32> -> vector<32x32xf32>
    %c0_10 = arith.constant 0 : index
    %c0_11 = arith.constant 0 : index
    %9 = vector.load %arg8[%c0_10, %c0_11] : memref<1x32xf32, #tpu.memory_space<vmem>>, vector<1x32xf32>
    %10 = vector.broadcast %9 : vector<1x32xf32> to vector<32x32xf32>
    %11 = arith.addf %8, %10 : vector<32x32xf32>
    %c0_12 = arith.constant 0 : index
    %c0_13 = arith.constant 0 : index
    %12 = vector.load %arg19[%c0_12, %c0_13] : memref<32x32xf32, #tpu.memory_space<vmem>>, vector<32x32xf32>
    tpu.vector_store %arg19[%c0_12, %c0_13], %11 {strides = array<i32>} : memref<32x32xf32, #tpu.memory_space<vmem>>, vector<32x32xf32>,
    %c0_14 = arith.constant 0 : index
    %c0_15 = arith.constant 0 : index
    %13 = vector.load %arg3[%c0_14, %c0_15] : memref<16x32xf32, #tpu.memory_space<vmem>>, vector<16x32xf32>
    %cst_16 = arith.constant dense<0.000000e+00> : vector<32x32xf32>
    %14 = tpu.matmul %0, %13, %cst_16 {dimension_numbers = #tpu.dot_dimension_numbers<[1], [0], [0], [1], [0, 0, 1, 1], [], []>} : vector<32x16xf32>, vector<16x32xf32>, vector<32x32xf32> -> vector<32x32xf32>
    %c0_17 = arith.constant 0 : index
    %c0_18 = arith.constant 0 : index
    %15 = vector.load %arg9[%c0_17, %c0_18] : memref<1x32xf32, #tpu.memory_space<vmem>>, vector<1x32xf32>
    %16 = vector.broadcast %15 : vector<1x32xf32> to vector<32x32xf32>
    %17 = arith.addf %14, %16 : vector<32x32xf32>
    %c0_19 = arith.constant 0 : index
    %c0_20 = arith.constant 0 : index
    %18 = vector.load %arg20[%c0_19, %c0_20] : memref<32x32xf32, #tpu.memory_space<vmem>>, vector<32x32xf32>
    tpu.vector_store %arg20[%c0_19, %c0_20], %17 {strides = array<i32>} : memref<32x32xf32, #tpu.memory_space<vmem>>, vector<32x32xf32>,
    %c0_21 = arith.constant 0 : index
    %c0_22 = arith.constant 0 : index
    %19 = vector.load %arg4[%c0_21, %c0_22] : memref<32x32xf32, #tpu.memory_space<vmem>>, vector<32x32xf32>
    %c0_23 = arith.constant 0 : index
    %c0_24 = arith.constant 0 : index
    %20 = vector.load %arg5[%c0_23, %c0_24] : memref<32x32xf32, #tpu.memory_space<vmem>>, vector<32x32xf32>
    %c0_25 = arith.constant 0 : index
    %c0_26 = arith.constant 0 : index
    %21 = vector.load %arg6[%c0_25, %c0_26] : memref<32x32xf32, #tpu.memory_space<vmem>>, vector<32x32xf32>
    %c0_27 = arith.constant 0 : index
    %c0_28 = arith.constant 0 : index
    %22 = vector.load %arg10[%c0_27, %c0_28] : memref<1x32xf32, #tpu.memory_space<vmem>>, vector<1x32xf32>
    %23 = vector.shape_cast %22 : vector<1x32xf32> to vector<1x32xf32>
    %24 = vector.broadcast %23 : vector<1x32xf32> to vector<4x32xf32>
    %cst_29 = arith.constant 0.000000e+00 : f32
    %25 = vector.broadcast %cst_29 : f32 to vector<4x32xf32>
    %c0_i32 = arith.constant 0 : i32
    %c4_i32 = arith.constant 4 : i32
    %26 = arith.muli %c0_i32, %c4_i32 : i32
    %27 = tpu.assume_multiple %26, 4 : i32
    %28 = arith.index_cast %27 : i32 to index
    %c0_30 = arith.constant 0 : index
    %29 = vector.load %arg18[%28, %c0_30] : memref<32x32xf32, #tpu.memory_space<vmem>>, vector<4x32xf32>
    %30 = arith.index_cast %27 : i32 to index
    %c0_31 = arith.constant 0 : index
    %31 = vector.load %arg19[%30, %c0_31] : memref<32x32xf32, #tpu.memory_space<vmem>>, vector<4x32xf32>
    %32 = arith.index_cast %27 : i32 to index
    %c0_32 = arith.constant 0 : index
    %33 = vector.load %arg20[%32, %c0_32] : memref<32x32xf32, #tpu.memory_space<vmem>>, vector<4x32xf32>
    %cst_33 = arith.constant dense<0.000000e+00> : vector<4x32xf32>
    %34 = tpu.matmul %25, %19, %cst_33 {dimension_numbers = #tpu.dot_dimension_numbers<[1], [0], [0], [1], [0, 0, 1, 1], [], []>} : vector<4x32xf32>, vector<32x32xf32>, vector<4x32xf32> -> vector<4x32xf32>
    %35 = arith.addf %29, %34 : vector<4x32xf32>
    %36 = arith.negf %35 : vector<4x32xf32>
    %37 = math.exp %36 : vector<4x32xf32>
    %cst_34 = arith.constant 1.000000e+00 : f32
    %38 = vector.broadcast %cst_34 : f32 to vector<4x32xf32>
    %39 = arith.addf %38, %37 : vector<4x32xf32>
    %40 = arith.divf %38, %39 : vector<4x32xf32>
    %cst_35 = arith.constant dense<0.000000e+00> : vector<4x32xf32>
    %41 = tpu.matmul %25, %20, %cst_35 {dimension_numbers = #tpu.dot_dimension_numbers<[1], [0], [0], [1], [0, 0, 1, 1], [], []>} : vector<4x32xf32>, vector<32x32xf32>, vector<4x32xf32> -> vector<4x32xf32>
    %42 = arith.addf %31, %41 : vector<4x32xf32>
    %43 = arith.negf %42 : vector<4x32xf32>
    %44 = math.exp %43 : vector<4x32xf32>
    %cst_36 = arith.constant 1.000000e+00 : f32
    %45 = vector.broadcast %cst_36 : f32 to vector<4x32xf32>
    %46 = arith.addf %45, %44 : vector<4x32xf32>
    %47 = arith.divf %45, %46 : vector<4x32xf32>
    %cst_37 = arith.constant dense<0.000000e+00> : vector<4x32xf32>
    %48 = tpu.matmul %25, %21, %cst_37 {dimension_numbers = #tpu.dot_dimension_numbers<[1], [0], [0], [1], [0, 0, 1, 1], [], []>} : vector<4x32xf32>, vector<32x32xf32>, vector<4x32xf32> -> vector<4x32xf32>
    %49 = arith.addf %48, %24 : vector<4x32xf32>
    %50 = arith.mulf %40, %49 : vector<4x32xf32>
    %51 = arith.addf %33, %50 : vector<4x32xf32>
    %52 = math.tanh %51 : vector<4x32xf32>
    %cst_38 = arith.constant 1.000000e+00 : f32
    %53 = vector.broadcast %cst_38 : f32 to vector<4x32xf32>
    %54 = arith.subf %53, %47 : vector<4x32xf32>
    %55 = arith.mulf %54, %52 : vector<4x32xf32>
    %56 = arith.mulf %47, %25 : vector<4x32xf32>
    %57 = arith.addf %55, %56 : vector<4x32xf32>
    %c1_i32 = arith.constant 1 : i32
    %c4_i32_39 = arith.constant 4 : i32
    %58 = arith.muli %c1_i32, %c4_i32_39 : i32
    %59 = tpu.assume_multiple %58, 4 : i32
    %60 = arith.index_cast %59 : i32 to index
    %c0_40 = arith.constant 0 : index
    %61 = vector.load %arg18[%60, %c0_40] : memref<32x32xf32, #tpu.memory_space<vmem>>, vector<4x32xf32>
    %62 = arith.index_cast %59 : i32 to index
    %c0_41 = arith.constant 0 : index
    %63 = vector.load %arg19[%62, %c0_41] : memref<32x32xf32, #tpu.memory_space<vmem>>, vector<4x32xf32>
    %64 = arith.index_cast %59 : i32 to index
    %c0_42 = arith.constant 0 : index
    %65 = vector.load %arg20[%64, %c0_42] : memref<32x32xf32, #tpu.memory_space<vmem>>, vector<4x32xf32>
    %cst_43 = arith.constant dense<0.000000e+00> : vector<4x32xf32>
    %66 = tpu.matmul %57, %19, %cst_43 {dimension_numbers = #tpu.dot_dimension_numbers<[1], [0], [0], [1], [0, 0, 1, 1], [], []>} : vector<4x32xf32>, vector<32x32xf32>, vector<4x32xf32> -> vector<4x32xf32>
    %67 = arith.addf %61, %66 : vector<4x32xf32>
    %68 = arith.negf %67 : vector<4x32xf32>
    %69 = math.exp %68 : vector<4x32xf32>
    %cst_44 = arith.constant 1.000000e+00 : f32
    %70 = vector.broadcast %cst_44 : f32 to vector<4x32xf32>
    %71 = arith.addf %70, %69 : vector<4x32xf32>
    %72 = arith.divf %70, %71 : vector<4x32xf32>
    %cst_45 = arith.constant dense<0.000000e+00> : vector<4x32xf32>
    %73 = tpu.matmul %57, %20, %cst_45 {dimension_numbers = #tpu.dot_dimension_numbers<[1], [0], [0], [1], [0, 0, 1, 1], [], []>} : vector<4x32xf32>, vector<32x32xf32>, vector<4x32xf32> -> vector<4x32xf32>
    %74 = arith.addf %63, %73 : vector<4x32xf32>
    %75 = arith.negf %74 : vector<4x32xf32>
    %76 = math.exp %75 : vector<4x32xf32>
    %cst_46 = arith.constant 1.000000e+00 : f32
    %77 = vector.broadcast %cst_46 : f32 to vector<4x32xf32>
    %78 = arith.addf %77, %76 : vector<4x32xf32>
    %79 = arith.divf %77, %78 : vector<4x32xf32>
    %cst_47 = arith.constant dense<0.000000e+00> : vector<4x32xf32>
    %80 = tpu.matmul %57, %21, %cst_47 {dimension_numbers = #tpu.dot_dimension_numbers<[1], [0], [0], [1], [0, 0, 1, 1], [], []>} : vector<4x32xf32>, vector<32x32xf32>, vector<4x32xf32> -> vector<4x32xf32>
    %81 = arith.addf %80, %24 : vector<4x32xf32>
    %82 = arith.mulf %72, %81 : vector<4x32xf32>
    %83 = arith.addf %65, %82 : vector<4x32xf32>
    %84 = math.tanh %83 : vector<4x32xf32>
    %cst_48 = arith.constant 1.000000e+00 : f32
    %85 = vector.broadcast %cst_48 : f32 to vector<4x32xf32>
    %86 = arith.subf %85, %79 : vector<4x32xf32>
    %87 = arith.mulf %86, %84 : vector<4x32xf32>
    %88 = arith.mulf %79, %57 : vector<4x32xf32>
    %89 = arith.addf %87, %88 : vector<4x32xf32>
    %c2_i32 = arith.constant 2 : i32
    %c4_i32_49 = arith.constant 4 : i32
    %90 = arith.muli %c2_i32, %c4_i32_49 : i32
    %91 = tpu.assume_multiple %90, 4 : i32
    %92 = arith.index_cast %91 : i32 to index
    %c0_50 = arith.constant 0 : index
    %93 = vector.load %arg18[%92, %c0_50] : memref<32x32xf32, #tpu.memory_space<vmem>>, vector<4x32xf32>
    %94 = arith.index_cast %91 : i32 to index
    %c0_51 = arith.constant 0 : index
    %95 = vector.load %arg19[%94, %c0_51] : memref<32x32xf32, #tpu.memory_space<vmem>>, vector<4x32xf32>
    %96 = arith.index_cast %91 : i32 to index
    %c0_52 = arith.constant 0 : index
    %97 = vector.load %arg20[%96, %c0_52] : memref<32x32xf32, #tpu.memory_space<vmem>>, vector<4x32xf32>
    %cst_53 = arith.constant dense<0.000000e+00> : vector<4x32xf32>
    %98 = tpu.matmul %89, %19, %cst_53 {dimension_numbers = #tpu.dot_dimension_numbers<[1], [0], [0], [1], [0, 0, 1, 1], [], []>} : vector<4x32xf32>, vector<32x32xf32>, vector<4x32xf32> -> vector<4x32xf32>
    %99 = arith.addf %93, %98 : vector<4x32xf32>
    %100 = arith.negf %99 : vector<4x32xf32>
    %101 = math.exp %100 : vector<4x32xf32>
    %cst_54 = arith.constant 1.000000e+00 : f32
    %102 = vector.broadcast %cst_54 : f32 to vector<4x32xf32>
    %103 = arith.addf %102, %101 : vector<4x32xf32>
    %104 = arith.divf %102, %103 : vector<4x32xf32>
    %cst_55 = arith.constant dense<0.000000e+00> : vector<4x32xf32>
    %105 = tpu.matmul %89, %20, %cst_55 {dimension_numbers = #tpu.dot_dimension_numbers<[1], [0], [0], [1], [0, 0, 1, 1], [], []>} : vector<4x32xf32>, vector<32x32xf32>, vector<4x32xf32> -> vector<4x32xf32>
    %106 = arith.addf %95, %105 : vector<4x32xf32>
    %107 = arith.negf %106 : vector<4x32xf32>
    %108 = math.exp %107 : vector<4x32xf32>
    %cst_56 = arith.constant 1.000000e+00 : f32
    %109 = vector.broadcast %cst_56 : f32 to vector<4x32xf32>
    %110 = arith.addf %109, %108 : vector<4x32xf32>
    %111 = arith.divf %109, %110 : vector<4x32xf32>
    %cst_57 = arith.constant dense<0.000000e+00> : vector<4x32xf32>
    %112 = tpu.matmul %89, %21, %cst_57 {dimension_numbers = #tpu.dot_dimension_numbers<[1], [0], [0], [1], [0, 0, 1, 1], [], []>} : vector<4x32xf32>, vector<32x32xf32>, vector<4x32xf32> -> vector<4x32xf32>
    %113 = arith.addf %112, %24 : vector<4x32xf32>
    %114 = arith.mulf %104, %113 : vector<4x32xf32>
    %115 = arith.addf %97, %114 : vector<4x32xf32>
    %116 = math.tanh %115 : vector<4x32xf32>
    %cst_58 = arith.constant 1.000000e+00 : f32
    %117 = vector.broadcast %cst_58 : f32 to vector<4x32xf32>
    %118 = arith.subf %117, %111 : vector<4x32xf32>
    %119 = arith.mulf %118, %116 : vector<4x32xf32>
    %120 = arith.mulf %111, %89 : vector<4x32xf32>
    %121 = arith.addf %119, %120 : vector<4x32xf32>
    %c3_i32 = arith.constant 3 : i32
    %c4_i32_59 = arith.constant 4 : i32
    %122 = arith.muli %c3_i32, %c4_i32_59 : i32
    %123 = tpu.assume_multiple %122, 4 : i32
    %124 = arith.index_cast %123 : i32 to index
    %c0_60 = arith.constant 0 : index
    %125 = vector.load %arg18[%124, %c0_60] : memref<32x32xf32, #tpu.memory_space<vmem>>, vector<4x32xf32>
    %126 = arith.index_cast %123 : i32 to index
    %c0_61 = arith.constant 0 : index
    %127 = vector.load %arg19[%126, %c0_61] : memref<32x32xf32, #tpu.memory_space<vmem>>, vector<4x32xf32>
    %128 = arith.index_cast %123 : i32 to index
    %c0_62 = arith.constant 0 : index
    %129 = vector.load %arg20[%128, %c0_62] : memref<32x32xf32, #tpu.memory_space<vmem>>, vector<4x32xf32>
    %cst_63 = arith.constant dense<0.000000e+00> : vector<4x32xf32>
    %130 = tpu.matmul %121, %19, %cst_63 {dimension_numbers = #tpu.dot_dimension_numbers<[1], [0], [0], [1], [0, 0, 1, 1], [], []>} : vector<4x32xf32>, vector<32x32xf32>, vector<4x32xf32> -> vector<4x32xf32>
    %131 = arith.addf %125, %130 : vector<4x32xf32>
    %132 = arith.negf %131 : vector<4x32xf32>
    %133 = math.exp %132 : vector<4x32xf32>
    %cst_64 = arith.constant 1.000000e+00 : f32
    %134 = vector.broadcast %cst_64 : f32 to vector<4x32xf32>
    %135 = arith.addf %134, %133 : vector<4x32xf32>
    %136 = arith.divf %134, %135 : vector<4x32xf32>
    %cst_65 = arith.constant dense<0.000000e+00> : vector<4x32xf32>
    %137 = tpu.matmul %121, %20, %cst_65 {dimension_numbers = #tpu.dot_dimension_numbers<[1], [0], [0], [1], [0, 0, 1, 1], [], []>} : vector<4x32xf32>, vector<32x32xf32>, vector<4x32xf32> -> vector<4x32xf32>
    %138 = arith.addf %127, %137 : vector<4x32xf32>
    %139 = arith.negf %138 : vector<4x32xf32>
    %140 = math.exp %139 : vector<4x32xf32>
    %cst_66 = arith.constant 1.000000e+00 : f32
    %141 = vector.broadcast %cst_66 : f32 to vector<4x32xf32>
    %142 = arith.addf %141, %140 : vector<4x32xf32>
    %143 = arith.divf %141, %142 : vector<4x32xf32>
    %cst_67 = arith.constant dense<0.000000e+00> : vector<4x32xf32>
    %144 = tpu.matmul %121, %21, %cst_67 {dimension_numbers = #tpu.dot_dimension_numbers<[1], [0], [0], [1], [0, 0, 1, 1], [], []>} : vector<4x32xf32>, vector<32x32xf32>, vector<4x32xf32> -> vector<4x32xf32>
    %145 = arith.addf %144, %24 : vector<4x32xf32>
    %146 = arith.mulf %136, %145 : vector<4x32xf32>
    %147 = arith.addf %129, %146 : vector<4x32xf32>
    %148 = math.tanh %147 : vector<4x32xf32>
    %cst_68 = arith.constant 1.000000e+00 : f32
    %149 = vector.broadcast %cst_68 : f32 to vector<4x32xf32>
    %150 = arith.subf %149, %143 : vector<4x32xf32>
    %151 = arith.mulf %150, %148 : vector<4x32xf32>
    %152 = arith.mulf %143, %121 : vector<4x32xf32>
    %153 = arith.addf %151, %152 : vector<4x32xf32>
    %c4_i32_69 = arith.constant 4 : i32
    %c4_i32_70 = arith.constant 4 : i32
    %154 = arith.muli %c4_i32_69, %c4_i32_70 : i32
    %155 = tpu.assume_multiple %154, 4 : i32
    %156 = arith.index_cast %155 : i32 to index
    %c0_71 = arith.constant 0 : index
    %157 = vector.load %arg18[%156, %c0_71] : memref<32x32xf32, #tpu.memory_space<vmem>>, vector<4x32xf32>
    %158 = arith.index_cast %155 : i32 to index
    %c0_72 = arith.constant 0 : index
    %159 = vector.load %arg19[%158, %c0_72] : memref<32x32xf32, #tpu.memory_space<vmem>>, vector<4x32xf32>
    %160 = arith.index_cast %155 : i32 to index
    %c0_73 = arith.constant 0 : index
    %161 = vector.load %arg20[%160, %c0_73] : memref<32x32xf32, #tpu.memory_space<vmem>>, vector<4x32xf32>
    %cst_74 = arith.constant dense<0.000000e+00> : vector<4x32xf32>
    %162 = tpu.matmul %153, %19, %cst_74 {dimension_numbers = #tpu.dot_dimension_numbers<[1], [0], [0], [1], [0, 0, 1, 1], [], []>} : vector<4x32xf32>, vector<32x32xf32>, vector<4x32xf32> -> vector<4x32xf32>
    %163 = arith.addf %157, %162 : vector<4x32xf32>
    %164 = arith.negf %163 : vector<4x32xf32>
    %165 = math.exp %164 : vector<4x32xf32>
    %cst_75 = arith.constant 1.000000e+00 : f32
    %166 = vector.broadcast %cst_75 : f32 to vector<4x32xf32>
    %167 = arith.addf %166, %165 : vector<4x32xf32>
    %168 = arith.divf %166, %167 : vector<4x32xf32>
    %cst_76 = arith.constant dense<0.000000e+00> : vector<4x32xf32>
    %169 = tpu.matmul %153, %20, %cst_76 {dimension_numbers = #tpu.dot_dimension_numbers<[1], [0], [0], [1], [0, 0, 1, 1], [], []>} : vector<4x32xf32>, vector<32x32xf32>, vector<4x32xf32> -> vector<4x32xf32>
    %170 = arith.addf %159, %169 : vector<4x32xf32>
    %171 = arith.negf %170 : vector<4x32xf32>
    %172 = math.exp %171 : vector<4x32xf32>
    %cst_77 = arith.constant 1.000000e+00 : f32
    %173 = vector.broadcast %cst_77 : f32 to vector<4x32xf32>
    %174 = arith.addf %173, %172 : vector<4x32xf32>
    %175 = arith.divf %173, %174 : vector<4x32xf32>
    %cst_78 = arith.constant dense<0.000000e+00> : vector<4x32xf32>
    %176 = tpu.matmul %153, %21, %cst_78 {dimension_numbers = #tpu.dot_dimension_numbers<[1], [0], [0], [1], [0, 0, 1, 1], [], []>} : vector<4x32xf32>, vector<32x32xf32>, vector<4x32xf32> -> vector<4x32xf32>
    %177 = arith.addf %176, %24 : vector<4x32xf32>
    %178 = arith.mulf %168, %177 : vector<4x32xf32>
    %179 = arith.addf %161, %178 : vector<4x32xf32>
    %180 = math.tanh %179 : vector<4x32xf32>
    %cst_79 = arith.constant 1.000000e+00 : f32
    %181 = vector.broadcast %cst_79 : f32 to vector<4x32xf32>
    %182 = arith.subf %181, %175 : vector<4x32xf32>
    %183 = arith.mulf %182, %180 : vector<4x32xf32>
    %184 = arith.mulf %175, %153 : vector<4x32xf32>
    %185 = arith.addf %183, %184 : vector<4x32xf32>
    %c5_i32 = arith.constant 5 : i32
    %c4_i32_80 = arith.constant 4 : i32
    %186 = arith.muli %c5_i32, %c4_i32_80 : i32
    %187 = tpu.assume_multiple %186, 4 : i32
    %188 = arith.index_cast %187 : i32 to index
    %c0_81 = arith.constant 0 : index
    %189 = vector.load %arg18[%188, %c0_81] : memref<32x32xf32, #tpu.memory_space<vmem>>, vector<4x32xf32>
    %190 = arith.index_cast %187 : i32 to index
    %c0_82 = arith.constant 0 : index
    %191 = vector.load %arg19[%190, %c0_82] : memref<32x32xf32, #tpu.memory_space<vmem>>, vector<4x32xf32>
    %192 = arith.index_cast %187 : i32 to index
    %c0_83 = arith.constant 0 : index
    %193 = vector.load %arg20[%192, %c0_83] : memref<32x32xf32, #tpu.memory_space<vmem>>, vector<4x32xf32>
    %cst_84 = arith.constant dense<0.000000e+00> : vector<4x32xf32>
    %194 = tpu.matmul %185, %19, %cst_84 {dimension_numbers = #tpu.dot_dimension_numbers<[1], [0], [0], [1], [0, 0, 1, 1], [], []>} : vector<4x32xf32>, vector<32x32xf32>, vector<4x32xf32> -> vector<4x32xf32>
    %195 = arith.addf %189, %194 : vector<4x32xf32>
    %196 = arith.negf %195 : vector<4x32xf32>
    %197 = math.exp %196 : vector<4x32xf32>
    %cst_85 = arith.constant 1.000000e+00 : f32
    %198 = vector.broadcast %cst_85 : f32 to vector<4x32xf32>
    %199 = arith.addf %198, %197 : vector<4x32xf32>
    %200 = arith.divf %198, %199 : vector<4x32xf32>
    %cst_86 = arith.constant dense<0.000000e+00> : vector<4x32xf32>
    %201 = tpu.matmul %185, %20, %cst_86 {dimension_numbers = #tpu.dot_dimension_numbers<[1], [0], [0], [1], [0, 0, 1, 1], [], []>} : vector<4x32xf32>, vector<32x32xf32>, vector<4x32xf32> -> vector<4x32xf32>
    %202 = arith.addf %191, %201 : vector<4x32xf32>
    %203 = arith.negf %202 : vector<4x32xf32>
    %204 = math.exp %203 : vector<4x32xf32>
    %cst_87 = arith.constant 1.000000e+00 : f32
    %205 = vector.broadcast %cst_87 : f32 to vector<4x32xf32>
    %206 = arith.addf %205, %204 : vector<4x32xf32>
    %207 = arith.divf %205, %206 : vector<4x32xf32>
    %cst_88 = arith.constant dense<0.000000e+00> : vector<4x32xf32>
    %208 = tpu.matmul %185, %21, %cst_88 {dimension_numbers = #tpu.dot_dimension_numbers<[1], [0], [0], [1], [0, 0, 1, 1], [], []>} : vector<4x32xf32>, vector<32x32xf32>, vector<4x32xf32> -> vector<4x32xf32>
    %209 = arith.addf %208, %24 : vector<4x32xf32>
    %210 = arith.mulf %200, %209 : vector<4x32xf32>
    %211 = arith.addf %193, %210 : vector<4x32xf32>
    %212 = math.tanh %211 : vector<4x32xf32>
    %cst_89 = arith.constant 1.000000e+00 : f32
    %213 = vector.broadcast %cst_89 : f32 to vector<4x32xf32>
    %214 = arith.subf %213, %207 : vector<4x32xf32>
    %215 = arith.mulf %214, %212 : vector<4x32xf32>
    %216 = arith.mulf %207, %185 : vector<4x32xf32>
    %217 = arith.addf %215, %216 : vector<4x32xf32>
    %c6_i32 = arith.constant 6 : i32
    %c4_i32_90 = arith.constant 4 : i32
    %218 = arith.muli %c6_i32, %c4_i32_90 : i32
    %219 = tpu.assume_multiple %218, 4 : i32
    %220 = arith.index_cast %219 : i32 to index
    %c0_91 = arith.constant 0 : index
    %221 = vector.load %arg18[%220, %c0_91] : memref<32x32xf32, #tpu.memory_space<vmem>>, vector<4x32xf32>
    %222 = arith.index_cast %219 : i32 to index
    %c0_92 = arith.constant 0 : index
    %223 = vector.load %arg19[%222, %c0_92] : memref<32x32xf32, #tpu.memory_space<vmem>>, vector<4x32xf32>
    %224 = arith.index_cast %219 : i32 to index
    %c0_93 = arith.constant 0 : index
    %225 = vector.load %arg20[%224, %c0_93] : memref<32x32xf32, #tpu.memory_space<vmem>>, vector<4x32xf32>
    %cst_94 = arith.constant dense<0.000000e+00> : vector<4x32xf32>
    %226 = tpu.matmul %217, %19, %cst_94 {dimension_numbers = #tpu.dot_dimension_numbers<[1], [0], [0], [1], [0, 0, 1, 1], [], []>} : vector<4x32xf32>, vector<32x32xf32>, vector<4x32xf32> -> vector<4x32xf32>
    %227 = arith.addf %221, %226 : vector<4x32xf32>
    %228 = arith.negf %227 : vector<4x32xf32>
    %229 = math.exp %228 : vector<4x32xf32>
    %cst_95 = arith.constant 1.000000e+00 : f32
    %230 = vector.broadcast %cst_95 : f32 to vector<4x32xf32>
    %231 = arith.addf %230, %229 : vector<4x32xf32>
    %232 = arith.divf %230, %231 : vector<4x32xf32>
    %cst_96 = arith.constant dense<0.000000e+00> : vector<4x32xf32>
    %233 = tpu.matmul %217, %20, %cst_96 {dimension_numbers = #tpu.dot_dimension_numbers<[1], [0], [0], [1], [0, 0, 1, 1], [], []>} : vector<4x32xf32>, vector<32x32xf32>, vector<4x32xf32> -> vector<4x32xf32>
    %234 = arith.addf %223, %233 : vector<4x32xf32>
    %235 = arith.negf %234 : vector<4x32xf32>
    %236 = math.exp %235 : vector<4x32xf32>
    %cst_97 = arith.constant 1.000000e+00 : f32
    %237 = vector.broadcast %cst_97 : f32 to vector<4x32xf32>
    %238 = arith.addf %237, %236 : vector<4x32xf32>
    %239 = arith.divf %237, %238 : vector<4x32xf32>
    %cst_98 = arith.constant dense<0.000000e+00> : vector<4x32xf32>
    %240 = tpu.matmul %217, %21, %cst_98 {dimension_numbers = #tpu.dot_dimension_numbers<[1], [0], [0], [1], [0, 0, 1, 1], [], []>} : vector<4x32xf32>, vector<32x32xf32>, vector<4x32xf32> -> vector<4x32xf32>
    %241 = arith.addf %240, %24 : vector<4x32xf32>
    %242 = arith.mulf %232, %241 : vector<4x32xf32>
    %243 = arith.addf %225, %242 : vector<4x32xf32>
    %244 = math.tanh %243 : vector<4x32xf32>
    %cst_99 = arith.constant 1.000000e+00 : f32
    %245 = vector.broadcast %cst_99 : f32 to vector<4x32xf32>
    %246 = arith.subf %245, %239 : vector<4x32xf32>
    %247 = arith.mulf %246, %244 : vector<4x32xf32>
    %248 = arith.mulf %239, %217 : vector<4x32xf32>
    %249 = arith.addf %247, %248 : vector<4x32xf32>
    %c7_i32 = arith.constant 7 : i32
    %c4_i32_100 = arith.constant 4 : i32
    %250 = arith.muli %c7_i32, %c4_i32_100 : i32
    %251 = tpu.assume_multiple %250, 4 : i32
    %252 = arith.index_cast %251 : i32 to index
    %c0_101 = arith.constant 0 : index
    %253 = vector.load %arg18[%252, %c0_101] : memref<32x32xf32, #tpu.memory_space<vmem>>, vector<4x32xf32>
    %254 = arith.index_cast %251 : i32 to index
    %c0_102 = arith.constant 0 : index
    %255 = vector.load %arg19[%254, %c0_102] : memref<32x32xf32, #tpu.memory_space<vmem>>, vector<4x32xf32>
    %256 = arith.index_cast %251 : i32 to index
    %c0_103 = arith.constant 0 : index
    %257 = vector.load %arg20[%256, %c0_103] : memref<32x32xf32, #tpu.memory_space<vmem>>, vector<4x32xf32>
    %cst_104 = arith.constant dense<0.000000e+00> : vector<4x32xf32>
    %258 = tpu.matmul %249, %19, %cst_104 {dimension_numbers = #tpu.dot_dimension_numbers<[1], [0], [0], [1], [0, 0, 1, 1], [], []>} : vector<4x32xf32>, vector<32x32xf32>, vector<4x32xf32> -> vector<4x32xf32>
    %259 = arith.addf %253, %258 : vector<4x32xf32>
    %260 = arith.negf %259 : vector<4x32xf32>
    %261 = math.exp %260 : vector<4x32xf32>
    %cst_105 = arith.constant 1.000000e+00 : f32
    %262 = vector.broadcast %cst_105 : f32 to vector<4x32xf32>
    %263 = arith.addf %262, %261 : vector<4x32xf32>
    %264 = arith.divf %262, %263 : vector<4x32xf32>
    %cst_106 = arith.constant dense<0.000000e+00> : vector<4x32xf32>
    %265 = tpu.matmul %249, %20, %cst_106 {dimension_numbers = #tpu.dot_dimension_numbers<[1], [0], [0], [1], [0, 0, 1, 1], [], []>} : vector<4x32xf32>, vector<32x32xf32>, vector<4x32xf32> -> vector<4x32xf32>
    %266 = arith.addf %255, %265 : vector<4x32xf32>
    %267 = arith.negf %266 : vector<4x32xf32>
    %268 = math.exp %267 : vector<4x32xf32>
    %cst_107 = arith.constant 1.000000e+00 : f32
    %269 = vector.broadcast %cst_107 : f32 to vector<4x32xf32>
    %270 = arith.addf %269, %268 : vector<4x32xf32>
    %271 = arith.divf %269, %270 : vector<4x32xf32>
    %cst_108 = arith.constant dense<0.000000e+00> : vector<4x32xf32>
    %272 = tpu.matmul %249, %21, %cst_108 {dimension_numbers = #tpu.dot_dimension_numbers<[1], [0], [0], [1], [0, 0, 1, 1], [], []>} : vector<4x32xf32>, vector<32x32xf32>, vector<4x32xf32> -> vector<4x32xf32>
    %273 = arith.addf %272, %24 : vector<4x32xf32>
    %274 = arith.mulf %264, %273 : vector<4x32xf32>
    %275 = arith.addf %257, %274 : vector<4x32xf32>
    %276 = math.tanh %275 : vector<4x32xf32>
    %cst_109 = arith.constant 1.000000e+00 : f32
    %277 = vector.broadcast %cst_109 : f32 to vector<4x32xf32>
    %278 = arith.subf %277, %271 : vector<4x32xf32>
    %279 = arith.mulf %278, %276 : vector<4x32xf32>
    %280 = arith.mulf %271, %249 : vector<4x32xf32>
    %281 = arith.addf %279, %280 : vector<4x32xf32>
    %c8_i32 = arith.constant 8 : i32
    %282 = vector.extract_strided_slice %281 {offsets = [0, 0], sizes = [2, 32], strides = [1, 1]} : vector<4x32xf32> to vector<2x32xf32>
    %283 = vector.extract_strided_slice %281 {offsets = [2, 0], sizes = [2, 32], strides = [1, 1]} : vector<4x32xf32> to vector<2x32xf32>
    %c0_110 = arith.constant 0 : index
    %c0_111 = arith.constant 0 : index
    %284 = vector.load %arg11[%c0_110, %c0_111] : memref<32x16xf32, #tpu.memory_space<vmem>>, vector<32x16xf32>
    %cst_112 = arith.constant dense<0.000000e+00> : vector<2x16xf32>
    %285 = tpu.matmul %282, %284, %cst_112 {dimension_numbers = #tpu.dot_dimension_numbers<[1], [0], [0], [1], [0, 0, 1, 1], [], []>} : vector<2x32xf32>, vector<32x16xf32>, vector<2x16xf32> -> vector<2x16xf32>
    %c0_113 = arith.constant 0 : index
    %c0_114 = arith.constant 0 : index
    %286 = vector.load %arg12[%c0_113, %c0_114] : memref<32x16xf32, #tpu.memory_space<vmem>>, vector<32x16xf32>
    %cst_115 = arith.constant dense<0.000000e+00> : vector<2x16xf32>
    %287 = tpu.matmul %283, %286, %cst_115 {dimension_numbers = #tpu.dot_dimension_numbers<[1], [0], [0], [1], [0, 0, 1, 1], [], []>} : vector<2x32xf32>, vector<32x16xf32>, vector<2x16xf32> -> vector<2x16xf32>
    %288 = arith.addf %285, %287 : vector<2x16xf32>
    %c0_116 = arith.constant 0 : index
    %c0_117 = arith.constant 0 : index
    %289 = vector.load %arg13[%c0_116, %c0_117] : memref<1x16xf32, #tpu.memory_space<vmem>>, vector<1x16xf32>
    %290 = vector.broadcast %289 : vector<1x16xf32> to vector<2x16xf32>
    %291 = arith.addf %288, %290 : vector<2x16xf32>
    %cst_118 = arith.constant 0.000000e+00 : f32
    %292 = vector.broadcast %cst_118 : f32 to vector<2x16xf32>
    %c0_119 = arith.constant 0 : index
    %293 = memref.load %arg14[%c0_119] : memref<4xf32, #tpu.memory_space<smem>>
    %c16 = arith.constant 16 : index
    %c0_120 = arith.constant 0 : index
    %294 = vector.load %arg0[%c16, %c0_120] : memref<32x16xf32, #tpu.memory_space<vmem>>, vector<2x16xf32>
    %295 = vector.broadcast %293 : f32 to vector<2x16xf32>
    %296 = arith.mulf %295, %294 : vector<2x16xf32>
    %297 = arith.addf %292, %296 : vector<2x16xf32>
    %c1 = arith.constant 1 : index
    %298 = memref.load %arg14[%c1] : memref<4xf32, #tpu.memory_space<smem>>
    %c20 = arith.constant 20 : index
    %c0_121 = arith.constant 0 : index
    %299 = vector.load %arg0[%c20, %c0_121] : memref<32x16xf32, #tpu.memory_space<vmem>>, vector<2x16xf32>
    %300 = vector.broadcast %298 : f32 to vector<2x16xf32>
    %301 = arith.mulf %300, %299 : vector<2x16xf32>
    %302 = arith.addf %297, %301 : vector<2x16xf32>
    %c2 = arith.constant 2 : index
    %303 = memref.load %arg14[%c2] : memref<4xf32, #tpu.memory_space<smem>>
    %c24 = arith.constant 24 : index
    %c0_122 = arith.constant 0 : index
    %304 = vector.load %arg0[%c24, %c0_122] : memref<32x16xf32, #tpu.memory_space<vmem>>, vector<2x16xf32>
    %305 = vector.broadcast %303 : f32 to vector<2x16xf32>
    %306 = arith.mulf %305, %304 : vector<2x16xf32>
    %307 = arith.addf %302, %306 : vector<2x16xf32>
    %c3 = arith.constant 3 : index
    %308 = memref.load %arg14[%c3] : memref<4xf32, #tpu.memory_space<smem>>
    %c28 = arith.constant 28 : index
    %c0_123 = arith.constant 0 : index
    %309 = vector.load %arg0[%c28, %c0_123] : memref<32x16xf32, #tpu.memory_space<vmem>>, vector<2x16xf32>
    %310 = vector.broadcast %308 : f32 to vector<2x16xf32>
    %311 = arith.mulf %310, %309 : vector<2x16xf32>
    %312 = arith.addf %307, %311 : vector<2x16xf32>
    %c0_124 = arith.constant 0 : index
    %313 = memref.load %arg15[%c0_124] : memref<1xf32, #tpu.memory_space<smem>>
    %314 = vector.broadcast %313 : f32 to vector<2x16xf32>
    %315 = arith.addf %312, %314 : vector<2x16xf32>
    %c0_125 = arith.constant 0 : index
    %316 = memref.load %arg16[%c0_125] : memref<1xf32, #tpu.memory_space<smem>>
    %317 = vector.broadcast %316 : f32 to vector<2x16xf32>
    %318 = arith.mulf %291, %317 : vector<2x16xf32>
    %319 = arith.addf %318, %315 : vector<2x16xf32>
    %320 = arith.negf %319 : vector<2x16xf32>
    %321 = math.exp %320 : vector<2x16xf32>
    %cst_126 = arith.constant 1.000000e+00 : f32
    %322 = vector.broadcast %cst_126 : f32 to vector<2x16xf32>
    %323 = arith.addf %322, %321 : vector<2x16xf32>
    %324 = arith.divf %322, %323 : vector<2x16xf32>
    %c0_127 = arith.constant 0 : index
    %c0_128 = arith.constant 0 : index
    %325 = vector.load %arg17[%c0_127, %c0_128] : memref<2x16xf32, #tpu.memory_space<vmem>>, vector<2x16xf32>
    tpu.vector_store %arg17[%c0_127, %c0_128], %324 {strides = array<i32>} : memref<2x16xf32, #tpu.memory_space<vmem>>, vector<2x16xf32>,
    return
  }
}

</mosaic_0001>

<llo_original>
// kernel: tpu_custom_call.1
$region0: #{tpu_custom_call.1}
  #allocation0 [shape = 'u32[]', space=smem, size = 0x4, offset = 0x4, fixed_abs, tag = 'smem constant byte address 0x4 - core index']
  #allocation1 [shape = 'u32[72,128]{1,0:T(1,128)}', space=vmem, size = 0x9000, scoped, tag = 'internal scratch']
  #allocation2 [shape = 'f32[32,32]{1,0:T(8,128)}', space=vmem, size = 0x4000, scoped, tag = 'scratch operand']
  #allocation3 [shape = 'f32[32,32]{1,0:T(8,128)}', space=vmem, size = 0x4000, scoped, tag = 'scratch operand']
  #allocation4 [shape = 'f32[32,32]{1,0:T(8,128)}', space=vmem, size = 0x4000, scoped, tag = 'scratch operand']
  #allocation5 [shape = 'f32[1]{0:T(128)S(6)}', space=smem, size = 0x200, scoped, tag = 'scoped memory for tpu_custom_call.1']
  #allocation6 [shape = 'f32[1]{0:T(128)S(6)}', space=smem, size = 0x200, scoped, tag = 'scoped memory for tpu_custom_call.1']
  %s0 = inlined_call_operand.vmem [shape: f32[32,16], index: 0, kind: input, shape index: {}]
  %s1 = inlined_call_operand.vmem [shape: f32[16,32], index: 1, kind: input, shape index: {}]
  %s2 = inlined_call_operand.hbm [shape: f32[16,32], index: 2, kind: input, shape index: {}]
  %s3 = inlined_call_operand.hbm [shape: f32[16,32], index: 3, kind: input, shape index: {}]
  %s4 = inlined_call_operand.vmem [shape: f32[32,32], index: 4, kind: input, shape index: {}]
  %s5 = inlined_call_operand.vmem [shape: f32[32,32], index: 5, kind: input, shape index: {}]
  %s6 = inlined_call_operand.vmem [shape: f32[32,32], index: 6, kind: input, shape index: {}]
  %s7 = inlined_call_operand.vmem [shape: f32[1,32], index: 7, kind: input, shape index: {}]
  %s8 = inlined_call_operand.vmem [shape: f32[1,32], index: 8, kind: input, shape index: {}]
  %s9 = inlined_call_operand.vmem [shape: f32[1,32], index: 9, kind: input, shape index: {}]
  %s10 = inlined_call_operand.vmem [shape: f32[1,32], index: 10, kind: input, shape index: {}]
  %s11 = inlined_call_operand.vmem [shape: f32[32,16], index: 11, kind: input, shape index: {}]
  %s12 = inlined_call_operand.vmem [shape: f32[32,16], index: 12, kind: input, shape index: {}]
  %s13 = inlined_call_operand.vmem [shape: f32[1,16], index: 13, kind: input, shape index: {}]
  %s14 = inlined_call_operand.vmem [shape: f32[4], index: 14, kind: input, shape index: {}]
  %s15 = inlined_call_operand.<no memory space> [shape: f32[1], index: 15, kind: input, shape index: {}]
  %s16 = inlined_call_operand.<no memory space> [shape: f32[1], index: 16, kind: input, shape index: {}]
  %s17 = inlined_call_operand.hbm [shape: f32[2,16], index: 17, kind: output, shape index: {}]
  %s18 = sld [smem:[#allocation0]]
  $region90: #{tpu_custom_call.1} parent=0
    _
  %s20 = ssub.s32 1, %s18
  %s21 = scalar_select 0, %s20, %s18
  %22 = sst [smem:[#allocation5]] %s15
  %23 = sst [smem:[#allocation6]] %s16
  $region1: #{tpu_custom_call.1} parent=0
    #allocation7 [shape = 'u8[8192]{0}', space=vmem, size = 0x2000, scoped, tag = 'input window, operand 2, single buffered']
    #allocation8 [shape = 's32[1]{0}', space=sflag, size = 0x4, scoped, tag = 'scoped memory for tpu_custom_call.1']
    #allocation9 [shape = 's32[1]{0}', space=sflag, size = 0x4, scoped, tag = 'scoped memory for tpu_custom_call.1']
    #allocation10 [shape = 's32[1]{0}', space=sflag, size = 0x4, scoped, tag = 'scoped memory for tpu_custom_call.1']
    #allocation11 [shape = 'u8[8192]{0}', space=vmem, size = 0x2000, scoped, tag = 'input window, operand 3, single buffered']
    #allocation12 [shape = 's32[1]{0}', space=sflag, size = 0x4, scoped, tag = 'scoped memory for tpu_custom_call.1']
    #allocation13 [shape = 'u8[512]{0}', space=smem, size = 0x200, scoped, tag = 'input window, operand 14, single buffered']
    #allocation14 [shape = 'u8[1024]{0}', space=vmem, size = 0x400, scoped, tag = 'output window, operand 0, single buffered']
    %24 = vsyncpa [#allocation8], 0
    %25 = vsyncpa [#allocation12], 0
    %26 = vsyncpa [#allocation10], 0
    %27 = vsyncpa [#allocation9], 0
    // Predicated region
    $region2: #{tpu_custom_call.1} parent=1 // pred_check
      _
    $region3: #{tpu_custom_call.1} parent=1 // pred_check_branch
      %29 = sbr.rel (0) target = $region5
    $region4: #{tpu_custom_call.1} parent=1 // pred_region
      _
    $region5: #{tpu_custom_call.1} parent=1 // pred_fallthru
      _
    // Predicated region
    $region6: #{tpu_custom_call.1} parent=1 // pred_check
      _
    $region7: #{tpu_custom_call.1} parent=1 // pred_check_branch
      %31 = sbr.rel (0) target = $region9
    $region8: #{tpu_custom_call.1} parent=1 // pred_region
      _
    $region9: #{tpu_custom_call.1} parent=1 // pred_fallthru
      _
    // Predicated region
    $region10: #{tpu_custom_call.1} parent=1 // pred_check
      _
    $region11: #{tpu_custom_call.1} parent=1 // pred_check_branch
      %33 = sbr.rel (0) target = $region13
    $region12: #{tpu_custom_call.1} parent=1 // pred_region
      %35 = vsyncadd [#allocation8], 0
      %s36 = sshll.u32 %s2, 4
      %s37 = int_to_ptr.hbm [resolvable:$true] %s36
      %s38 = sshll.u32 [#allocation7], 4
      %s39 = int_to_ptr.vmem [resolvable:$true] %s38
      %44 = dma.hbm_to_vmem [thread:$0]  %s37, 256, %s39, [#allocation8], 128, 128, 8
    $region13: #{tpu_custom_call.1} parent=1 // pred_fallthru
      _
    // Predicated region
    $region14: #{tpu_custom_call.1} parent=1 // pred_check
      _
    $region15: #{tpu_custom_call.1} parent=1 // pred_check_branch
      %46 = sbr.rel (0) target = $region17
    $region16: #{tpu_custom_call.1} parent=1 // pred_region
      %48 = vsyncadd [#allocation12], 0
      %s49 = sshll.u32 %s3, 4
      %s50 = int_to_ptr.hbm [resolvable:$true] %s49
      %s51 = sshll.u32 [#allocation11], 4
      %s52 = int_to_ptr.vmem [resolvable:$true] %s51
      %57 = dma.hbm_to_vmem [thread:$0]  %s50, 256, %s52, [#allocation12], 128, 128, 8
    $region17: #{tpu_custom_call.1} parent=1 // pred_fallthru
      _
    // Predicated region
    $region18: #{tpu_custom_call.1} parent=1 // pred_check
      _
    $region19: #{tpu_custom_call.1} parent=1 // pred_check_branch
      %59 = sbr.rel (0) target = $region21
    $region20: #{tpu_custom_call.1} parent=1 // pred_region
      _
    $region21: #{tpu_custom_call.1} parent=1 // pred_fallthru
      _
    // Predicated region
    $region22: #{tpu_custom_call.1} parent=1 // pred_check
      _
    $region23: #{tpu_custom_call.1} parent=1 // pred_check_branch
      %61 = sbr.rel (0) target = $region25
    $region24: #{tpu_custom_call.1} parent=1 // pred_region
      _
    $region25: #{tpu_custom_call.1} parent=1 // pred_fallthru
      _
    // Predicated region
    $region26: #{tpu_custom_call.1} parent=1 // pred_check
      _
    $region27: #{tpu_custom_call.1} parent=1 // pred_check_branch
      %63 = sbr.rel (0) target = $region29
    $region28: #{tpu_custom_call.1} parent=1 // pred_region
      _
    $region29: #{tpu_custom_call.1} parent=1 // pred_fallthru
      _
    // Predicated region
    $region30: #{tpu_custom_call.1} parent=1 // pred_check
      _
    $region31: #{tpu_custom_call.1} parent=1 // pred_check_branch
      %65 = sbr.rel (0) target = $region33
    $region32: #{tpu_custom_call.1} parent=1 // pred_region
      _
    $region33: #{tpu_custom_call.1} parent=1 // pred_fallthru
      _
    // Predicated region
    $region34: #{tpu_custom_call.1} parent=1 // pred_check
      _
    $region35: #{tpu_custom_call.1} parent=1 // pred_check_branch
      %67 = sbr.rel (0) target = $region37
    $region36: #{tpu_custom_call.1} parent=1 // pred_region
      _
    $region37: #{tpu_custom_call.1} parent=1 // pred_fallthru
      _
    // Predicated region
    $region38: #{tpu_custom_call.1} parent=1 // pred_check
      _
    $region39: #{tpu_custom_call.1} parent=1 // pred_check_branch
      %69 = sbr.rel (0) target = $region41
    $region40: #{tpu_custom_call.1} parent=1 // pred_region
      _
    $region41: #{tpu_custom_call.1} parent=1 // pred_fallthru
      _
    // Predicated region
    $region42: #{tpu_custom_call.1} parent=1 // pred_check
      _
    $region43: #{tpu_custom_call.1} parent=1 // pred_check_branch
      %71 = sbr.rel (0) target = $region45
    $region44: #{tpu_custom_call.1} parent=1 // pred_region
      _
    $region45: #{tpu_custom_call.1} parent=1 // pred_fallthru
      _
    // Predicated region
    $region46: #{tpu_custom_call.1} parent=1 // pred_check
      _
    $region47: #{tpu_custom_call.1} parent=1 // pred_check_branch
      %73 = sbr.rel (0) target = $region49
    $region48: #{tpu_custom_call.1} parent=1 // pred_region
      _
    $region49: #{tpu_custom_call.1} parent=1 // pred_fallthru
      _
    // Predicated region
    $region50: #{tpu_custom_call.1} parent=1 // pred_check
      _
    $region51: #{tpu_custom_call.1} parent=1 // pred_check_branch
      %75 = sbr.rel (0) target = $region53
    $region52: #{tpu_custom_call.1} parent=1 // pred_region
      _
    $region53: #{tpu_custom_call.1} parent=1 // pred_fallthru
      _
    // Predicated region
    $region54: #{tpu_custom_call.1} parent=1 // pred_check
      _
    $region55: #{tpu_custom_call.1} parent=1 // pred_check_branch
      %77 = sbr.rel (0) target = $region57
    $region56: #{tpu_custom_call.1} parent=1 // pred_region
      _
    $region57: #{tpu_custom_call.1} parent=1 // pred_fallthru
      _
    // Predicated region
    $region58: #{tpu_custom_call.1} parent=1 // pred_check
      _
    $region59: #{tpu_custom_call.1} parent=1 // pred_check_branch
      %79 = sbr.rel (0) target = $region61
    $region60: #{tpu_custom_call.1} parent=1 // pred_region
      %81 = vsyncadd [#allocation10], 0
      %s83 = sshll.u32 %s14, 4
      %s84 = int_to_ptr.vmem [resolvable:$true] %s83
      %86 = dma.vmem_to_smem %s84, 16, [#allocation13], [#allocation10]
    $region61: #{tpu_custom_call.1} parent=1 // pred_fallthru
      _
    // Predicated region
    $region62: #{tpu_custom_call.1} parent=1 // pred_check
      _
    $region63: #{tpu_custom_call.1} parent=1 // pred_check_branch
      %88 = sbr.rel (0) target = $region65
    $region64: #{tpu_custom_call.1} parent=1 // pred_region
      _
    $region65: #{tpu_custom_call.1} parent=1 // pred_fallthru
      _
    // Predicated region
    $region66: #{tpu_custom_call.1} parent=1 // pred_check
      _
    $region67: #{tpu_custom_call.1} parent=1 // pred_check_branch
      %90 = sbr.rel (0) target = $region69
    $region68: #{tpu_custom_call.1} parent=1 // pred_region
      _
    $region69: #{tpu_custom_call.1} parent=1 // pred_fallthru
      _
    // Predicated region
    $region70: #{tpu_custom_call.1} parent=1 // pred_check
      _
    $region71: #{tpu_custom_call.1} parent=1 // pred_check_branch
      %92 = sbr.rel (0) target = $region73
    $region72: #{tpu_custom_call.1} parent=1 // pred_region
      %94 = dma.done [#allocation8], 256
    $region73: #{tpu_custom_call.1} parent=1 // pred_fallthru
      _
    // Predicated region
    $region74: #{tpu_custom_call.1} parent=1 // pred_check
      _
    $region75: #{tpu_custom_call.1} parent=1 // pred_check_branch
      %96 = sbr.rel (0) target = $region77
    $region76: #{tpu_custom_call.1} parent=1 // pred_region
      %98 = dma.done [#allocation12], 256
    $region77: #{tpu_custom_call.1} parent=1 // pred_fallthru
      _
    // Predicated region
    $region78: #{tpu_custom_call.1} parent=1 // pred_check
      _
    $region79: #{tpu_custom_call.1} parent=1 // pred_check_branch
      %100 = sbr.rel (0) target = $region81
    $region80: #{tpu_custom_call.1} parent=1 // pred_region
      %102 = dma.done [#allocation10], 16
    $region81: #{tpu_custom_call.1} parent=1 // pred_fallthru
      _
    %103 = sfence
    %v104 = vld [vmem:[%s0] sm:$0xff]
    %v105 = vld [vmem:[%s0 + $0x8] sm:$0xff]
    %v106 = vld [vmem:[%s0 + $0x10] sm:$0xff]
    %v107 = vld [vmem:[%s0 + $0x18] sm:$0xff]
    %v108 = vld [vmem:[%s1] sm:$0xff]
    %v109 = vld [vmem:[%s1 + $0x8] sm:$0xff]
    %v110 = vld [vmem:[%s7] sm:$0x1]
    %v112 = vperm.slane %v110, 0
    %vm114 = vcmask 130048
    %v116 = vsel %vm114, %v104, 0
    %v119 = vsel %vm114, %v105, 0
    %v122 = vsel %vm114, %v106, 0
    %v125 = vsel %vm114, %v107, 0
    %127 = vmatpush.msra.mxu0 0.0
    %128 = vmatpush.msra.mxu0 0.0
    %129 = vmatpush.msra.mxu0 0.0
    %130 = vmatpush.msra.mxu0 0.0
    %131 = vmatpush.msra.mxu0 0.0
    %132 = vmatpush.msra.mxu0 0.0
    %133 = vmatpush.msra.mxu0 0.0
    %134 = vmatpush.msra.mxu0 0.0
    %135 = vmatpush.msra.mxu0 0.0
    %136 = vmatpush.msra.mxu0 0.0
    %137 = vmatpush.msra.mxu0 0.0
    %138 = vmatpush.msra.mxu0 0.0
    %139 = vmatpush.msra.mxu0 0.0
    %140 = vmatpush.msra.mxu0 0.0
    %141 = vmatpush.msra.mxu0 %v109
    %142 = vmatpush.msra.mxu0 %v108
    %143 = vmatmul.f32.gmra.mxu0 %v116
    %v144 = vpop.f32.mrf.mxu0
    %v145 = vadd.f32 %v112, %v144
    %146 = vmatmul.f32.gmra.mxu0 %v119
    %v147 = vpop.f32.mrf.mxu0
    %v148 = vadd.f32 %v112, %v147
    %149 = vmatmul.f32.gmra.mxu0 %v122
    %v150 = vpop.f32.mrf.mxu0
    %v151 = vadd.f32 %v112, %v150
    %152 = vmatmul.f32.gmra.mxu0 %v125
    %v153 = vpop.f32.mrf.mxu0
    %v154 = vadd.f32 %v112, %v153
    %155 = vdwg.mxu0
    %vm156 = vcmask 261120
    %157 = vst.msk [vmem:[#allocation2] sm:$0xff] %vm156, %v145
    %158 = vst.msk [vmem:[#allocation2 + $0x8] sm:$0xff] %vm156, %v148
    %159 = vst.msk [vmem:[#allocation2 + $0x10] sm:$0xff] %vm156, %v151
    %160 = vst.msk [vmem:[#allocation2 + $0x18] sm:$0xff] %vm156, %v154
    %v161 = vld [vmem:[#allocation7] sm:$0xff]
    %v162 = vld [vmem:[#allocation7 + $0x8] sm:$0xff]
    %v163 = vld [vmem:[%s8] sm:$0x1]
    %v165 = vperm.slane %v163, 0
    %167 = vmatpush.msra.mxu0 0.0
    %168 = vmatpush.msra.mxu0 0.0
    %169 = vmatpush.msra.mxu0 0.0
    %170 = vmatpush.msra.mxu0 0.0
    %171 = vmatpush.msra.mxu0 0.0
    %172 = vmatpush.msra.mxu0 0.0
    %173 = vmatpush.msra.mxu0 0.0
    %174 = vmatpush.msra.mxu0 0.0
    %175 = vmatpush.msra.mxu0 0.0
    %176 = vmatpush.msra.mxu0 0.0
    %177 = vmatpush.msra.mxu0 0.0
    %178 = vmatpush.msra.mxu0 0.0
    %179 = vmatpush.msra.mxu0 0.0
    %180 = vmatpush.msra.mxu0 0.0
    %181 = vmatpush.msra.mxu0 %v162
    %182 = vmatpush.msra.mxu0 %v161
    %183 = vmatmul.f32.gmra.mxu0 %v116
    %v184 = vpop.f32.mrf.mxu0
    %v185 = vadd.f32 %v165, %v184
    %186 = vmatmul.f32.gmra.mxu0 %v119
    %v187 = vpop.f32.mrf.mxu0
    %v188 = vadd.f32 %v165, %v187
    %189 = vmatmul.f32.gmra.mxu0 %v122
    %v190 = vpop.f32.mrf.mxu0
    %v191 = vadd.f32 %v165, %v190
    %192 = vmatmul.f32.gmra.mxu0 %v125
    %v193 = vpop.f32.mrf.mxu0
    %v194 = vadd.f32 %v165, %v193
    %195 = vdwg.mxu0
    %196 = vst.msk [vmem:[#allocation3] sm:$0xff] %vm156, %v185
    %197 = vst.msk [vmem:[#allocation3 + $0x8] sm:$0xff] %vm156, %v188
    %198 = vst.msk [vmem:[#allocation3 + $0x10] sm:$0xff] %vm156, %v191
    %199 = vst.msk [vmem:[#allocation3 + $0x18] sm:$0xff] %vm156, %v194
    %v200 = vld [vmem:[#allocation11] sm:$0xff]
    %v201 = vld [vmem:[#allocation11 + $0x8] sm:$0xff]
    %v202 = vld [vmem:[%s9] sm:$0x1]
    %v204 = vperm.slane %v202, 0
    %206 = vmatpush.msra.mxu0 0.0
    %207 = vmatpush.msra.mxu0 0.0
    %208 = vmatpush.msra.mxu0 0.0
    %209 = vmatpush.msra.mxu0 0.0
    %210 = vmatpush.msra.mxu0 0.0
    %211 = vmatpush.msra.mxu0 0.0
    %212 = vmatpush.msra.mxu0 0.0
    %213 = vmatpush.msra.mxu0 0.0
    %214 = vmatpush.msra.mxu0 0.0
    %215 = vmatpush.msra.mxu0 0.0
    %216 = vmatpush.msra.mxu0 0.0
    %217 = vmatpush.msra.mxu0 0.0
    %218 = vmatpush.msra.mxu0 0.0
    %219 = vmatpush.msra.mxu0 0.0
    %220 = vmatpush.msra.mxu0 %v201
    %221 = vmatpush.msra.mxu0 %v200
    %222 = vmatmul.f32.gmra.mxu0 %v116
    %v223 = vpop.f32.mrf.mxu0
    %v224 = vadd.f32 %v204, %v223
    %225 = vmatmul.f32.gmra.mxu0 %v119
    %v226 = vpop.f32.mrf.mxu0
    %v227 = vadd.f32 %v204, %v226
    %228 = vmatmul.f32.gmra.mxu0 %v122
    %v229 = vpop.f32.mrf.mxu0
    %v230 = vadd.f32 %v204, %v229
    %231 = vmatmul.f32.gmra.mxu0 %v125
    %v232 = vpop.f32.mrf.mxu0
    %v233 = vadd.f32 %v204, %v232
    %234 = vdwg.mxu0
    %235 = vst.msk [vmem:[#allocation4] sm:$0xff] %vm156, %v224
    %236 = vst.msk [vmem:[#allocation4 + $0x8] sm:$0xff] %vm156, %v227
    %237 = vst.msk [vmem:[#allocation4 + $0x10] sm:$0xff] %vm156, %v230
    %238 = vst.msk [vmem:[#allocation4 + $0x18] sm:$0xff] %vm156, %v233
    %v239 = vld [vmem:[%s4] sm:$0xff]
    %v240 = vld [vmem:[%s4 + $0x8] sm:$0xff]
    %v241 = vld [vmem:[%s4 + $0x10] sm:$0xff]
    %v242 = vld [vmem:[%s4 + $0x18] sm:$0xff]
    %v243 = vld [vmem:[%s5] sm:$0xff]
    %v244 = vld [vmem:[%s5 + $0x8] sm:$0xff]
    %v245 = vld [vmem:[%s5 + $0x10] sm:$0xff]
    %v246 = vld [vmem:[%s5 + $0x18] sm:$0xff]
    %v247 = vld [vmem:[%s6] sm:$0xff]
    %v248 = vld [vmem:[%s6 + $0x8] sm:$0xff]
    %v249 = vld [vmem:[%s6 + $0x10] sm:$0xff]
    %v250 = vld [vmem:[%s6 + $0x18] sm:$0xff]
    %v251 = vld [vmem:[%s10] sm:$0x1]
    %v253 = vperm.slane %v251, 0
    %v255 = vld [vmem:[#allocation2] sm:$0xf]
    %v256 = vld [vmem:[#allocation3] sm:$0xf]
    %v257 = vld [vmem:[#allocation4] sm:$0xf]
    %v259 = vsel %vm156, 0.0, 0
    %261 = vmatpush.msra.mxu0 0.0
    %262 = vmatpush.msra.mxu0 0.0
    %263 = vmatpush.msra.mxu0 0.0
    %264 = vmatpush.msra.mxu0 0.0
    %265 = vmatpush.msra.mxu0 0.0
    %266 = vmatpush.msra.mxu0 0.0
    %267 = vmatpush.msra.mxu0 0.0
    %268 = vmatpush.msra.mxu0 0.0
    %269 = vmatpush.msra.mxu0 0.0
    %270 = vmatpush.msra.mxu0 0.0
    %271 = vmatpush.msra.mxu0 0.0
    %272 = vmatpush.msra.mxu0 0.0
    %273 = vmatpush.msra.mxu0 %v242
    %274 = vmatpush.msra.mxu0 %v241
    %275 = vmatpush.msra.mxu0 %v240
    %276 = vmatpush.msra.mxu0 %v239
    %277 = vmatmul.f32.gmra.mxu0 %v259
    %v278 = vpop.f32.mrf.mxu0
    %v279 = vadd.f32 0.0, %v278
    %280 = vdwg.mxu0
    %v281 = vadd.f32 %v255, %v279
    %v282 = vxor.u32 %v281, 2147483648
    %v283 = vmul.f32 %v282, 1.442695
    %v284 = vpow.pop %v283
    %v285 = vadd.f32 %v284, 1.0
    %v286 = vrcp.pop %v285
    %v287 = vmul.f32 %v285, %v286
    %v288 = vsub.f32 1.0, %v287
    %v289 = vmul.f32 %v286, %v288
    %v290 = vadd.f32 %v286, %v289
    %vm291 = vweird.f32 %v285
    %vm292 = vweird.f32 %v286
    %vm293 = vmor %vm291, %vm292
    %v294 = vsel %vm293, %v286, %v290
    %v295 = vand.u32 2147483647, %v285
    %vm296 = vcmp.eq.f32.partialorder %v295, 8.507059e+37
    %v297 = vand.u32 %v285, 2147483648
    %v298 = vor.u32 1.1754944e-38, %v297
    %v299 = vsel %vm296, %v298, %v294
    %v300 = vmul.f32 1.0, %v299
    %301 = vmatpush.msra.mxu0 0.0
    %302 = vmatpush.msra.mxu0 0.0
    %303 = vmatpush.msra.mxu0 0.0
    %304 = vmatpush.msra.mxu0 0.0
    %305 = vmatpush.msra.mxu0 0.0
    %306 = vmatpush.msra.mxu0 0.0
    %307 = vmatpush.msra.mxu0 0.0
    %308 = vmatpush.msra.mxu0 0.0
    %309 = vmatpush.msra.mxu0 0.0
    %310 = vmatpush.msra.mxu0 0.0
    %311 = vmatpush.msra.mxu0 0.0
    %312 = vmatpush.msra.mxu0 0.0
    %313 = vmatpush.msra.mxu0 %v246
    %314 = vmatpush.msra.mxu0 %v245
    %315 = vmatpush.msra.mxu0 %v244
    %316 = vmatpush.msra.mxu0 %v243
    %317 = vmatmul.f32.gmra.mxu0 %v259
    %v318 = vpop.f32.mrf.mxu0
    %v319 = vadd.f32 0.0, %v318
    %320 = vdwg.mxu0
    %v321 = vadd.f32 %v256, %v319
    %v322 = vxor.u32 %v321, 2147483648
    %v323 = vmul.f32 %v322, 1.442695
    %v324 = vpow.pop %v323
    %v325 = vadd.f32 %v324, 1.0
    %v326 = vrcp.pop %v325
    %v327 = vmul.f32 %v325, %v326
    %v328 = vsub.f32 1.0, %v327
    %v329 = vmul.f32 %v326, %v328
    %v330 = vadd.f32 %v326, %v329
    %vm331 = vweird.f32 %v325
    %vm332 = vweird.f32 %v326
    %vm333 = vmor %vm331, %vm332
    %v334 = vsel %vm333, %v326, %v330
    %v335 = vand.u32 2147483647, %v325
    %vm336 = vcmp.eq.f32.partialorder %v335, 8.507059e+37
    %v337 = vand.u32 %v325, 2147483648
    %v338 = vor.u32 1.1754944e-38, %v337
    %v339 = vsel %vm336, %v338, %v334
    %v340 = vmul.f32 1.0, %v339
    %341 = vmatpush.msra.mxu0 0.0
    %342 = vmatpush.msra.mxu0 0.0
    %343 = vmatpush.msra.mxu0 0.0
    %344 = vmatpush.msra.mxu0 0.0
    %345 = vmatpush.msra.mxu0 0.0
    %346 = vmatpush.msra.mxu0 0.0
    %347 = vmatpush.msra.mxu0 0.0
    %348 = vmatpush.msra.mxu0 0.0
    %349 = vmatpush.msra.mxu0 0.0
    %350 = vmatpush.msra.mxu0 0.0
    %351 = vmatpush.msra.mxu0 0.0
    %352 = vmatpush.msra.mxu0 0.0
    %353 = vmatpush.msra.mxu0 %v250
    %354 = vmatpush.msra.mxu0 %v249
    %355 = vmatpush.msra.mxu0 %v248
    %356 = vmatpush.msra.mxu0 %v247
    %357 = vmatmul.f32.gmra.mxu0 %v259
    %v358 = vpop.f32.mrf.mxu0
    %v359 = vadd.f32 %v253, %v358
    %360 = vdwg.mxu0
    %v361 = vmul.f32 %v300, %v359
    %v362 = vadd.f32 %v257, %v361
    %v363 = vtanh.pop %v362
    %v364 = vsub.f32 1.0, %v340
    %v365 = vmul.f32 %v364, %v363
    %v366 = vmul.f32 %v340, 0.0
    %v367 = vadd.f32 %v365, %v366
    %s368 = scalar_lea.vmem [#allocation2], 4
    %v369 = vld [vmem:[%s368] sm:$0xf]
    %s370 = scalar_lea.vmem [#allocation3], 4
    %v371 = vld [vmem:[%s370] sm:$0xf]
    %s372 = scalar_lea.vmem [#allocation4], 4
    %v373 = vld [vmem:[%s372] sm:$0xf]
    %v375 = vsel %vm156, %v367, 0
    %377 = vmatpush.msra.mxu0 0.0
    %378 = vmatpush.msra.mxu0 0.0
    %379 = vmatpush.msra.mxu0 0.0
    %380 = vmatpush.msra.mxu0 0.0
    %381 = vmatpush.msra.mxu0 0.0
    %382 = vmatpush.msra.mxu0 0.0
    %383 = vmatpush.msra.mxu0 0.0
    %384 = vmatpush.msra.mxu0 0.0
    %385 = vmatpush.msra.mxu0 0.0
    %386 = vmatpush.msra.mxu0 0.0
    %387 = vmatpush.msra.mxu0 0.0
    %388 = vmatpush.msra.mxu0 0.0
    %389 = vmatpush.msra.mxu0 %v242
    %390 = vmatpush.msra.mxu0 %v241
    %391 = vmatpush.msra.mxu0 %v240
    %392 = vmatpush.msra.mxu0 %v239
    %393 = vmatmul.f32.gmra.mxu0 %v375
    %v394 = vpop.f32.mrf.mxu0
    %v395 = vadd.f32 0.0, %v394
    %396 = vdwg.mxu0
    %v397 = vadd.f32 %v369, %v395
    %v398 = vxor.u32 %v397, 2147483648
    %v399 = vmul.f32 %v398, 1.442695
    %v400 = vpow.pop %v399
    %v401 = vadd.f32 %v400, 1.0
    %v402 = vrcp.pop %v401
    %v403 = vmul.f32 %v401, %v402
    %v404 = vsub.f32 1.0, %v403
    %v405 = vmul.f32 %v402, %v404
    %v406 = vadd.f32 %v402, %v405
    %vm407 = vweird.f32 %v401
    %vm408 = vweird.f32 %v402
    %vm409 = vmor %vm407, %vm408
    %v410 = vsel %vm409, %v402, %v406
    %v411 = vand.u32 2147483647, %v401
    %vm412 = vcmp.eq.f32.partialorder %v411, 8.507059e+37
    %v413 = vand.u32 %v401, 2147483648
    %v414 = vor.u32 1.1754944e-38, %v413
    %v415 = vsel %vm412, %v414, %v410
    %v416 = vmul.f32 1.0, %v415
    %417 = vmatpush.msra.mxu0 0.0
    %418 = vmatpush.msra.mxu0 0.0
    %419 = vmatpush.msra.mxu0 0.0
    %420 = vmatpush.msra.mxu0 0.0
    %421 = vmatpush.msra.mxu0 0.0
    %422 = vmatpush.msra.mxu0 0.0
    %423 = vmatpush.msra.mxu0 0.0
    %424 = vmatpush.msra.mxu0 0.0
    %425 = vmatpush.msra.mxu0 0.0
    %426 = vmatpush.msra.mxu0 0.0
    %427 = vmatpush.msra.mxu0 0.0
    %428 = vmatpush.msra.mxu0 0.0
    %429 = vmatpush.msra.mxu0 %v246
    %430 = vmatpush.msra.mxu0 %v245
    %431 = vmatpush.msra.mxu0 %v244
    %432 = vmatpush.msra.mxu0 %v243
    %433 = vmatmul.f32.gmra.mxu0 %v375
    %v434 = vpop.f32.mrf.mxu0
    %v435 = vadd.f32 0.0, %v434
    %436 = vdwg.mxu0
    %v437 = vadd.f32 %v371, %v435
    %v438 = vxor.u32 %v437, 2147483648
    %v439 = vmul.f32 %v438, 1.442695
    %v440 = vpow.pop %v439
    %v441 = vadd.f32 %v440, 1.0
    %v442 = vrcp.pop %v441
    %v443 = vmul.f32 %v441, %v442
    %v444 = vsub.f32 1.0, %v443
    %v445 = vmul.f32 %v442, %v444
    %v446 = vadd.f32 %v442, %v445
    %vm447 = vweird.f32 %v441
    %vm448 = vweird.f32 %v442
    %vm449 = vmor %vm447, %vm448
    %v450 = vsel %vm449, %v442, %v446
    %v451 = vand.u32 2147483647, %v441
    %vm452 = vcmp.eq.f32.partialorder %v451, 8.507059e+37
    %v453 = vand.u32 %v441, 2147483648
    %v454 = vor.u32 1.1754944e-38, %v453
    %v455 = vsel %vm452, %v454, %v450
    %v456 = vmul.f32 1.0, %v455
    %457 = vmatpush.msra.mxu0 0.0
    %458 = vmatpush.msra.mxu0 0.0
    %459 = vmatpush.msra.mxu0 0.0
    %460 = vmatpush.msra.mxu0 0.0
    %461 = vmatpush.msra.mxu0 0.0
    %462 = vmatpush.msra.mxu0 0.0
    %463 = vmatpush.msra.mxu0 0.0
    %464 = vmatpush.msra.mxu0 0.0
    %465 = vmatpush.msra.mxu0 0.0
    %466 = vmatpush.msra.mxu0 0.0
    %467 = vmatpush.msra.mxu0 0.0
    %468 = vmatpush.msra.mxu0 0.0
    %469 = vmatpush.msra.mxu0 %v250
    %470 = vmatpush.msra.mxu0 %v249
    %471 = vmatpush.msra.mxu0 %v248
    %472 = vmatpush.msra.mxu0 %v247
    %473 = vmatmul.f32.gmra.mxu0 %v375
    %v474 = vpop.f32.mrf.mxu0
    %v475 = vadd.f32 %v253, %v474
    %476 = vdwg.mxu0
    %v477 = vmul.f32 %v416, %v475
    %v478 = vadd.f32 %v373, %v477
    %v479 = vtanh.pop %v478
    %v480 = vsub.f32 1.0, %v456
    %v481 = vmul.f32 %v480, %v479
    %v482 = vmul.f32 %v456, %v367
    %v483 = vadd.f32 %v481, %v482
    %s484 = scalar_lea.vmem [#allocation2], 8
    %v485 = vld [vmem:[%s484] sm:$0xf]
    %s486 = scalar_lea.vmem [#allocation3], 8
    %v487 = vld [vmem:[%s486] sm:$0xf]
    %s488 = scalar_lea.vmem [#allocation4], 8
    %v489 = vld [vmem:[%s488] sm:$0xf]
    %v491 = vsel %vm156, %v483, 0
    %493 = vmatpush.msra.mxu0 0.0
    %494 = vmatpush.msra.mxu0 0.0
    %495 = vmatpush.msra.mxu0 0.0
    %496 = vmatpush.msra.mxu0 0.0
    %497 = vmatpush.msra.mxu0 0.0
    %498 = vmatpush.msra.mxu0 0.0
    %499 = vmatpush.msra.mxu0 0.0
    %500 = vmatpush.msra.mxu0 0.0
    %501 = vmatpush.msra.mxu0 0.0
    %502 = vmatpush.msra.mxu0 0.0
    %503 = vmatpush.msra.mxu0 0.0
    %504 = vmatpush.msra.mxu0 0.0
    %505 = vmatpush.msra.mxu0 %v242
    %506 = vmatpush.msra.mxu0 %v241
    %507 = vmatpush.msra.mxu0 %v240
    %508 = vmatpush.msra.mxu0 %v239
    %509 = vmatmul.f32.gmra.mxu0 %v491
    %v510 = vpop.f32.mrf.mxu0
    %v511 = vadd.f32 0.0, %v510
    %512 = vdwg.mxu0
    %v513 = vadd.f32 %v485, %v511
    %v514 = vxor.u32 %v513, 2147483648
    %v515 = vmul.f32 %v514, 1.442695
    %v516 = vpow.pop %v515
    %v517 = vadd.f32 %v516, 1.0
    %v518 = vrcp.pop %v517
    %v519 = vmul.f32 %v517, %v518
    %v520 = vsub.f32 1.0, %v519
    %v521 = vmul.f32 %v518, %v520
    %v522 = vadd.f32 %v518, %v521
    %vm523 = vweird.f32 %v517
    %vm524 = vweird.f32 %v518
    %vm525 = vmor %vm523, %vm524
    %v526 = vsel %vm525, %v518, %v522
    %v527 = vand.u32 2147483647, %v517
    %vm528 = vcmp.eq.f32.partialorder %v527, 8.507059e+37
    %v529 = vand.u32 %v517, 2147483648
    %v530 = vor.u32 1.1754944e-38, %v529
    %v531 = vsel %vm528, %v530, %v526
    %v532 = vmul.f32 1.0, %v531
    %533 = vmatpush.msra.mxu0 0.0
    %534 = vmatpush.msra.mxu0 0.0
    %535 = vmatpush.msra.mxu0 0.0
    %536 = vmatpush.msra.mxu0 0.0
    %537 = vmatpush.msra.mxu0 0.0
    %538 = vmatpush.msra.mxu0 0.0
    %539 = vmatpush.msra.mxu0 0.0
    %540 = vmatpush.msra.mxu0 0.0
    %541 = vmatpush.msra.mxu0 0.0
    %542 = vmatpush.msra.mxu0 0.0
    %543 = vmatpush.msra.mxu0 0.0
    %544 = vmatpush.msra.mxu0 0.0
    %545 = vmatpush.msra.mxu0 %v246
    %546 = vmatpush.msra.mxu0 %v245
    %547 = vmatpush.msra.mxu0 %v244
    %548 = vmatpush.msra.mxu0 %v243
    %549 = vmatmul.f32.gmra.mxu0 %v491
    %v550 = vpop.f32.mrf.mxu0
    %v551 = vadd.f32 0.0, %v550
    %552 = vdwg.mxu0
    %v553 = vadd.f32 %v487, %v551
    %v554 = vxor.u32 %v553, 2147483648
    %v555 = vmul.f32 %v554, 1.442695
    %v556 = vpow.pop %v555
    %v557 = vadd.f32 %v556, 1.0
    %v558 = vrcp.pop %v557
    %v559 = vmul.f32 %v557, %v558
    %v560 = vsub.f32 1.0, %v559
    %v561 = vmul.f32 %v558, %v560
    %v562 = vadd.f32 %v558, %v561
    %vm563 = vweird.f32 %v557
    %vm564 = vweird.f32 %v558
    %vm565 = vmor %vm563, %vm564
    %v566 = vsel %vm565, %v558, %v562
    %v567 = vand.u32 2147483647, %v557
    %vm568 = vcmp.eq.f32.partialorder %v567, 8.507059e+37
    %v569 = vand.u32 %v557, 2147483648
    %v570 = vor.u32 1.1754944e-38, %v569
    %v571 = vsel %vm568, %v570, %v566
    %v572 = vmul.f32 1.0, %v571
    %573 = vmatpush.msra.mxu0 0.0
    %574 = vmatpush.msra.mxu0 0.0
    %575 = vmatpush.msra.mxu0 0.0
    %576 = vmatpush.msra.mxu0 0.0
    %577 = vmatpush.msra.mxu0 0.0
    %578 = vmatpush.msra.mxu0 0.0
    %579 = vmatpush.msra.mxu0 0.0
    %580 = vmatpush.msra.mxu0 0.0
    %581 = vmatpush.msra.mxu0 0.0
    %582 = vmatpush.msra.mxu0 0.0
    %583 = vmatpush.msra.mxu0 0.0
    %584 = vmatpush.msra.mxu0 0.0
    %585 = vmatpush.msra.mxu0 %v250
    %586 = vmatpush.msra.mxu0 %v249
    %587 = vmatpush.msra.mxu0 %v248
    %588 = vmatpush.msra.mxu0 %v247
    %589 = vmatmul.f32.gmra.mxu0 %v491
    %v590 = vpop.f32.mrf.mxu0
    %v591 = vadd.f32 %v253, %v590
    %592 = vdwg.mxu0
    %v593 = vmul.f32 %v532, %v591
    %v594 = vadd.f32 %v489, %v593
    %v595 = vtanh.pop %v594
    %v596 = vsub.f32 1.0, %v572
    %v597 = vmul.f32 %v596, %v595
    %v598 = vmul.f32 %v572, %v483
    %v599 = vadd.f32 %v597, %v598
    %s600 = scalar_lea.vmem [#allocation2], 12
    %v601 = vld [vmem:[%s600] sm:$0xf]
    %s602 = scalar_lea.vmem [#allocation3], 12
    %v603 = vld [vmem:[%s602] sm:$0xf]
    %s604 = scalar_lea.vmem [#allocation4], 12
    %v605 = vld [vmem:[%s604] sm:$0xf]
    %v607 = vsel %vm156, %v599, 0
    %609 = vmatpush.msra.mxu0 0.0
    %610 = vmatpush.msra.mxu0 0.0
    %611 = vmatpush.msra.mxu0 0.0
    %612 = vmatpush.msra.mxu0 0.0
    %613 = vmatpush.msra.mxu0 0.0
    %614 = vmatpush.msra.mxu0 0.0
    %615 = vmatpush.msra.mxu0 0.0
    %616 = vmatpush.msra.mxu0 0.0
    %617 = vmatpush.msra.mxu0 0.0
    %618 = vmatpush.msra.mxu0 0.0
    %619 = vmatpush.msra.mxu0 0.0
    %620 = vmatpush.msra.mxu0 0.0
    %621 = vmatpush.msra.mxu0 %v242
    %622 = vmatpush.msra.mxu0 %v241
    %623 = vmatpush.msra.mxu0 %v240
    %624 = vmatpush.msra.mxu0 %v239
    %625 = vmatmul.f32.gmra.mxu0 %v607
    %v626 = vpop.f32.mrf.mxu0
    %v627 = vadd.f32 0.0, %v626
    %628 = vdwg.mxu0
    %v629 = vadd.f32 %v601, %v627
    %v630 = vxor.u32 %v629, 2147483648
    %v631 = vmul.f32 %v630, 1.442695
    %v632 = vpow.pop %v631
    %v633 = vadd.f32 %v632, 1.0
    %v634 = vrcp.pop %v633
    %v635 = vmul.f32 %v633, %v634
    %v636 = vsub.f32 1.0, %v635
    %v637 = vmul.f32 %v634, %v636
    %v638 = vadd.f32 %v634, %v637
    %vm639 = vweird.f32 %v633
    %vm640 = vweird.f32 %v634
    %vm641 = vmor %vm639, %vm640
    %v642 = vsel %vm641, %v634, %v638
    %v643 = vand.u32 2147483647, %v633
    %vm644 = vcmp.eq.f32.partialorder %v643, 8.507059e+37
    %v645 = vand.u32 %v633, 2147483648
    %v646 = vor.u32 1.1754944e-38, %v645
    %v647 = vsel %vm644, %v646, %v642
    %v648 = vmul.f32 1.0, %v647
    %649 = vmatpush.msra.mxu0 0.0
    %650 = vmatpush.msra.mxu0 0.0
    %651 = vmatpush.msra.mxu0 0.0
    %652 = vmatpush.msra.mxu0 0.0
    %653 = vmatpush.msra.mxu0 0.0
    %654 = vmatpush.msra.mxu0 0.0
    %655 = vmatpush.msra.mxu0 0.0
    %656 = vmatpush.msra.mxu0 0.0
    %657 = vmatpush.msra.mxu0 0.0
    %658 = vmatpush.msra.mxu0 0.0
    %659 = vmatpush.msra.mxu0 0.0
    %660 = vmatpush.msra.mxu0 0.0
    %661 = vmatpush.msra.mxu0 %v246
    %662 = vmatpush.msra.mxu0 %v245
    %663 = vmatpush.msra.mxu0 %v244
    %664 = vmatpush.msra.mxu0 %v243
    %665 = vmatmul.f32.gmra.mxu0 %v607
    %v666 = vpop.f32.mrf.mxu0
    %v667 = vadd.f32 0.0, %v666
    %668 = vdwg.mxu0
    %v669 = vadd.f32 %v603, %v667
    %v670 = vxor.u32 %v669, 2147483648
    %v671 = vmul.f32 %v670, 1.442695
    %v672 = vpow.pop %v671
    %v673 = vadd.f32 %v672, 1.0
    %v674 = vrcp.pop %v673
    %v675 = vmul.f32 %v673, %v674
    %v676 = vsub.f32 1.0, %v675
    %v677 = vmul.f32 %v674, %v676
    %v678 = vadd.f32 %v674, %v677
    %vm679 = vweird.f32 %v673
    %vm680 = vweird.f32 %v674
    %vm681 = vmor %vm679, %vm680
    %v682 = vsel %vm681, %v674, %v678
    %v683 = vand.u32 2147483647, %v673
    %vm684 = vcmp.eq.f32.partialorder %v683, 8.507059e+37
    %v685 = vand.u32 %v673, 2147483648
    %v686 = vor.u32 1.1754944e-38, %v685
    %v687 = vsel %vm684, %v686, %v682
    %v688 = vmul.f32 1.0, %v687
    %689 = vmatpush.msra.mxu0 0.0
    %690 = vmatpush.msra.mxu0 0.0
    %691 = vmatpush.msra.mxu0 0.0
    %692 = vmatpush.msra.mxu0 0.0
    %693 = vmatpush.msra.mxu0 0.0
    %694 = vmatpush.msra.mxu0 0.0
    %695 = vmatpush.msra.mxu0 0.0
    %696 = vmatpush.msra.mxu0 0.0
    %697 = vmatpush.msra.mxu0 0.0
    %698 = vmatpush.msra.mxu0 0.0
    %699 = vmatpush.msra.mxu0 0.0
    %700 = vmatpush.msra.mxu0 0.0
    %701 = vmatpush.msra.mxu0 %v250
    %702 = vmatpush.msra.mxu0 %v249
    %703 = vmatpush.msra.mxu0 %v248
    %704 = vmatpush.msra.mxu0 %v247
    %705 = vmatmul.f32.gmra.mxu0 %v607
    %v706 = vpop.f32.mrf.mxu0
    %v707 = vadd.f32 %v253, %v706
    %708 = vdwg.mxu0
    %v709 = vmul.f32 %v648, %v707
    %v710 = vadd.f32 %v605, %v709
    %v711 = vtanh.pop %v710
    %v712 = vsub.f32 1.0, %v688
    %v713 = vmul.f32 %v712, %v711
    %v714 = vmul.f32 %v688, %v599
    %v715 = vadd.f32 %v713, %v714
    %s716 = scalar_lea.vmem [#allocation2], 16
    %v717 = vld [vmem:[%s716] sm:$0xf]
    %s718 = scalar_lea.vmem [#allocation3], 16
    %v719 = vld [vmem:[%s718] sm:$0xf]
    %s720 = scalar_lea.vmem [#allocation4], 16
    %v721 = vld [vmem:[%s720] sm:$0xf]
    %v723 = vsel %vm156, %v715, 0
    %725 = vmatpush.msra.mxu0 0.0
    %726 = vmatpush.msra.mxu0 0.0
    %727 = vmatpush.msra.mxu0 0.0
    %728 = vmatpush.msra.mxu0 0.0
    %729 = vmatpush.msra.mxu0 0.0
    %730 = vmatpush.msra.mxu0 0.0
    %731 = vmatpush.msra.mxu0 0.0
    %732 = vmatpush.msra.mxu0 0.0
    %733 = vmatpush.msra.mxu0 0.0
    %734 = vmatpush.msra.mxu0 0.0
    %735 = vmatpush.msra.mxu0 0.0
    %736 = vmatpush.msra.mxu0 0.0
    %737 = vmatpush.msra.mxu0 %v242
    %738 = vmatpush.msra.mxu0 %v241
    %739 = vmatpush.msra.mxu0 %v240
    %740 = vmatpush.msra.mxu0 %v239
    %741 = vmatmul.f32.gmra.mxu0 %v723
    %v742 = vpop.f32.mrf.mxu0
    %v743 = vadd.f32 0.0, %v742
    %744 = vdwg.mxu0
    %v745 = vadd.f32 %v717, %v743
    %v746 = vxor.u32 %v745, 2147483648
    %v747 = vmul.f32 %v746, 1.442695
    %v748 = vpow.pop %v747
    %v749 = vadd.f32 %v748, 1.0
    %v750 = vrcp.pop %v749
    %v751 = vmul.f32 %v749, %v750
    %v752 = vsub.f32 1.0, %v751
    %v753 = vmul.f32 %v750, %v752
    %v754 = vadd.f32 %v750, %v753
    %vm755 = vweird.f32 %v749
    %vm756 = vweird.f32 %v750
    %vm757 = vmor %vm755, %vm756
    %v758 = vsel %vm757, %v750, %v754
    %v759 = vand.u32 2147483647, %v749
    %vm760 = vcmp.eq.f32.partialorder %v759, 8.507059e+37
    %v761 = vand.u32 %v749, 2147483648
    %v762 = vor.u32 1.1754944e-38, %v761
    %v763 = vsel %vm760, %v762, %v758
    %v764 = vmul.f32 1.0, %v763
    %765 = vmatpush.msra.mxu0 0.0
    %766 = vmatpush.msra.mxu0 0.0
    %767 = vmatpush.msra.mxu0 0.0
    %768 = vmatpush.msra.mxu0 0.0
    %769 = vmatpush.msra.mxu0 0.0
    %770 = vmatpush.msra.mxu0 0.0
    %771 = vmatpush.msra.mxu0 0.0
    %772 = vmatpush.msra.mxu0 0.0
    %773 = vmatpush.msra.mxu0 0.0
    %774 = vmatpush.msra.mxu0 0.0
    %775 = vmatpush.msra.mxu0 0.0
    %776 = vmatpush.msra.mxu0 0.0
    %777 = vmatpush.msra.mxu0 %v246
    %778 = vmatpush.msra.mxu0 %v245
    %779 = vmatpush.msra.mxu0 %v244
    %780 = vmatpush.msra.mxu0 %v243
    %781 = vmatmul.f32.gmra.mxu0 %v723
    %v782 = vpop.f32.mrf.mxu0
    %v783 = vadd.f32 0.0, %v782
    %784 = vdwg.mxu0
    %v785 = vadd.f32 %v719, %v783
    %v786 = vxor.u32 %v785, 2147483648
    %v787 = vmul.f32 %v786, 1.442695
    %v788 = vpow.pop %v787
    %v789 = vadd.f32 %v788, 1.0
    %v790 = vrcp.pop %v789
    %v791 = vmul.f32 %v789, %v790
    %v792 = vsub.f32 1.0, %v791
    %v793 = vmul.f32 %v790, %v792
    %v794 = vadd.f32 %v790, %v793
    %vm795 = vweird.f32 %v789
    %vm796 = vweird.f32 %v790
    %vm797 = vmor %vm795, %vm796
    %v798 = vsel %vm797, %v790, %v794
    %v799 = vand.u32 2147483647, %v789
    %vm800 = vcmp.eq.f32.partialorder %v799, 8.507059e+37
    %v801 = vand.u32 %v789, 2147483648
    %v802 = vor.u32 1.1754944e-38, %v801
    %v803 = vsel %vm800, %v802, %v798
    %v804 = vmul.f32 1.0, %v803
    %805 = vmatpush.msra.mxu0 0.0
    %806 = vmatpush.msra.mxu0 0.0
    %807 = vmatpush.msra.mxu0 0.0
    %808 = vmatpush.msra.mxu0 0.0
    %809 = vmatpush.msra.mxu0 0.0
    %810 = vmatpush.msra.mxu0 0.0
    %811 = vmatpush.msra.mxu0 0.0
    %812 = vmatpush.msra.mxu0 0.0
    %813 = vmatpush.msra.mxu0 0.0
    %814 = vmatpush.msra.mxu0 0.0
    %815 = vmatpush.msra.mxu0 0.0
    %816 = vmatpush.msra.mxu0 0.0
    %817 = vmatpush.msra.mxu0 %v250
    %818 = vmatpush.msra.mxu0 %v249
    %819 = vmatpush.msra.mxu0 %v248
    %820 = vmatpush.msra.mxu0 %v247
    %821 = vmatmul.f32.gmra.mxu0 %v723
    %v822 = vpop.f32.mrf.mxu0
    %v823 = vadd.f32 %v253, %v822
    %824 = vdwg.mxu0
    %v825 = vmul.f32 %v764, %v823
    %v826 = vadd.f32 %v721, %v825
    %v827 = vtanh.pop %v826
    %v828 = vsub.f32 1.0, %v804
    %v829 = vmul.f32 %v828, %v827
    %v830 = vmul.f32 %v804, %v715
    %v831 = vadd.f32 %v829, %v830
    %s832 = scalar_lea.vmem [#allocation2], 20
    %v833 = vld [vmem:[%s832] sm:$0xf]
    %s834 = scalar_lea.vmem [#allocation3], 20
    %v835 = vld [vmem:[%s834] sm:$0xf]
    %s836 = scalar_lea.vmem [#allocation4], 20
    %v837 = vld [vmem:[%s836] sm:$0xf]
    %v839 = vsel %vm156, %v831, 0
    %841 = vmatpush.msra.mxu0 0.0
    %842 = vmatpush.msra.mxu0 0.0
    %843 = vmatpush.msra.mxu0 0.0
    %844 = vmatpush.msra.mxu0 0.0
    %845 = vmatpush.msra.mxu0 0.0
    %846 = vmatpush.msra.mxu0 0.0
    %847 = vmatpush.msra.mxu0 0.0
    %848 = vmatpush.msra.mxu0 0.0
    %849 = vmatpush.msra.mxu0 0.0
    %850 = vmatpush.msra.mxu0 0.0
    %851 = vmatpush.msra.mxu0 0.0
    %852 = vmatpush.msra.mxu0 0.0
    %853 = vmatpush.msra.mxu0 %v242
    %854 = vmatpush.msra.mxu0 %v241
    %855 = vmatpush.msra.mxu0 %v240
    %856 = vmatpush.msra.mxu0 %v239
    %857 = vmatmul.f32.gmra.mxu0 %v839
    %v858 = vpop.f32.mrf.mxu0
    %v859 = vadd.f32 0.0, %v858
    %860 = vdwg.mxu0
    %v861 = vadd.f32 %v833, %v859
    %v862 = vxor.u32 %v861, 2147483648
    %v863 = vmul.f32 %v862, 1.442695
    %v864 = vpow.pop %v863
    %v865 = vadd.f32 %v864, 1.0
    %v866 = vrcp.pop %v865
    %v867 = vmul.f32 %v865, %v866
    %v868 = vsub.f32 1.0, %v867
    %v869 = vmul.f32 %v866, %v868
    %v870 = vadd.f32 %v866, %v869
    %vm871 = vweird.f32 %v865
    %vm872 = vweird.f32 %v866
    %vm873 = vmor %vm871, %vm872
    %v874 = vsel %vm873, %v866, %v870
    %v875 = vand.u32 2147483647, %v865
    %vm876 = vcmp.eq.f32.partialorder %v875, 8.507059e+37
    %v877 = vand.u32 %v865, 2147483648
    %v878 = vor.u32 1.1754944e-38, %v877
    %v879 = vsel %vm876, %v878, %v874
    %v880 = vmul.f32 1.0, %v879
    %881 = vmatpush.msra.mxu0 0.0
    %882 = vmatpush.msra.mxu0 0.0
    %883 = vmatpush.msra.mxu0 0.0
    %884 = vmatpush.msra.mxu0 0.0
    %885 = vmatpush.msra.mxu0 0.0
    %886 = vmatpush.msra.mxu0 0.0
    %887 = vmatpush.msra.mxu0 0.0
    %888 = vmatpush.msra.mxu0 0.0
    %889 = vmatpush.msra.mxu0 0.0
    %890 = vmatpush.msra.mxu0 0.0
    %891 = vmatpush.msra.mxu0 0.0
    %892 = vmatpush.msra.mxu0 0.0
    %893 = vmatpush.msra.mxu0 %v246
    %894 = vmatpush.msra.mxu0 %v245
    %895 = vmatpush.msra.mxu0 %v244
    %896 = vmatpush.msra.mxu0 %v243
    %897 = vmatmul.f32.gmra.mxu0 %v839
    %v898 = vpop.f32.mrf.mxu0
    %v899 = vadd.f32 0.0, %v898
    %900 = vdwg.mxu0
    %v901 = vadd.f32 %v835, %v899
    %v902 = vxor.u32 %v901, 2147483648
    %v903 = vmul.f32 %v902, 1.442695
    %v904 = vpow.pop %v903
    %v905 = vadd.f32 %v904, 1.0
    %v906 = vrcp.pop %v905
    %v907 = vmul.f32 %v905, %v906
    %v908 = vsub.f32 1.0, %v907
    %v909 = vmul.f32 %v906, %v908
    %v910 = vadd.f32 %v906, %v909
    %vm911 = vweird.f32 %v905
    %vm912 = vweird.f32 %v906
    %vm913 = vmor %vm911, %vm912
    %v914 = vsel %vm913, %v906, %v910
    %v915 = vand.u32 2147483647, %v905
    %vm916 = vcmp.eq.f32.partialorder %v915, 8.507059e+37
    %v917 = vand.u32 %v905, 2147483648
    %v918 = vor.u32 1.1754944e-38, %v917
    %v919 = vsel %vm916, %v918, %v914
    %v920 = vmul.f32 1.0, %v919
    %921 = vmatpush.msra.mxu0 0.0
    %922 = vmatpush.msra.mxu0 0.0
    %923 = vmatpush.msra.mxu0 0.0
    %924 = vmatpush.msra.mxu0 0.0
    %925 = vmatpush.msra.mxu0 0.0
    %926 = vmatpush.msra.mxu0 0.0
    %927 = vmatpush.msra.mxu0 0.0
    %928 = vmatpush.msra.mxu0 0.0
    %929 = vmatpush.msra.mxu0 0.0
    %930 = vmatpush.msra.mxu0 0.0
    %931 = vmatpush.msra.mxu0 0.0
    %932 = vmatpush.msra.mxu0 0.0
    %933 = vmatpush.msra.mxu0 %v250
    %934 = vmatpush.msra.mxu0 %v249
    %935 = vmatpush.msra.mxu0 %v248
    %936 = vmatpush.msra.mxu0 %v247
    %937 = vmatmul.f32.gmra.mxu0 %v839
    %v938 = vpop.f32.mrf.mxu0
    %v939 = vadd.f32 %v253, %v938
    %940 = vdwg.mxu0
    %v941 = vmul.f32 %v880, %v939
    %v942 = vadd.f32 %v837, %v941
    %v943 = vtanh.pop %v942
    %v944 = vsub.f32 1.0, %v920
    %v945 = vmul.f32 %v944, %v943
    %v946 = vmul.f32 %v920, %v831
    %v947 = vadd.f32 %v945, %v946
    %s948 = scalar_lea.vmem [#allocation2], 24
    %v949 = vld [vmem:[%s948] sm:$0xf]
    %s950 = scalar_lea.vmem [#allocation3], 24
    %v951 = vld [vmem:[%s950] sm:$0xf]
    %s952 = scalar_lea.vmem [#allocation4], 24
    %v953 = vld [vmem:[%s952] sm:$0xf]
    %v955 = vsel %vm156, %v947, 0
    %957 = vmatpush.msra.mxu0 0.0
    %958 = vmatpush.msra.mxu0 0.0
    %959 = vmatpush.msra.mxu0 0.0
    %960 = vmatpush.msra.mxu0 0.0
    %961 = vmatpush.msra.mxu0 0.0
    %962 = vmatpush.msra.mxu0 0.0
    %963 = vmatpush.msra.mxu0 0.0
    %964 = vmatpush.msra.mxu0 0.0
    %965 = vmatpush.msra.mxu0 0.0
    %966 = vmatpush.msra.mxu0 0.0
    %967 = vmatpush.msra.mxu0 0.0
    %968 = vmatpush.msra.mxu0 0.0
    %969 = vmatpush.msra.mxu0 %v242
    %970 = vmatpush.msra.mxu0 %v241
    %971 = vmatpush.msra.mxu0 %v240
    %972 = vmatpush.msra.mxu0 %v239
    %973 = vmatmul.f32.gmra.mxu0 %v955
    %v974 = vpop.f32.mrf.mxu0
    %v975 = vadd.f32 0.0, %v974
    %976 = vdwg.mxu0
    %v977 = vadd.f32 %v949, %v975
    %v978 = vxor.u32 %v977, 2147483648
    %v979 = vmul.f32 %v978, 1.442695
    %v980 = vpow.pop %v979
    %v981 = vadd.f32 %v980, 1.0
    %v982 = vrcp.pop %v981
    %v983 = vmul.f32 %v981, %v982
    %v984 = vsub.f32 1.0, %v983
    %v985 = vmul.f32 %v982, %v984
    %v986 = vadd.f32 %v982, %v985
    %vm987 = vweird.f32 %v981
    %vm988 = vweird.f32 %v982
    %vm989 = vmor %vm987, %vm988
    %v990 = vsel %vm989, %v982, %v986
    %v991 = vand.u32 2147483647, %v981
    %vm992 = vcmp.eq.f32.partialorder %v991, 8.507059e+37
    %v993 = vand.u32 %v981, 2147483648
    %v994 = vor.u32 1.1754944e-38, %v993
    %v995 = vsel %vm992, %v994, %v990
    %v996 = vmul.f32 1.0, %v995
    %997 = vmatpush.msra.mxu0 0.0
    %998 = vmatpush.msra.mxu0 0.0
    %999 = vmatpush.msra.mxu0 0.0
    %1000 = vmatpush.msra.mxu0 0.0
    %1001 = vmatpush.msra.mxu0 0.0
    %1002 = vmatpush.msra.mxu0 0.0
    %1003 = vmatpush.msra.mxu0 0.0
    %1004 = vmatpush.msra.mxu0 0.0
    %1005 = vmatpush.msra.mxu0 0.0
    %1006 = vmatpush.msra.mxu0 0.0
    %1007 = vmatpush.msra.mxu0 0.0
    %1008 = vmatpush.msra.mxu0 0.0
    %1009 = vmatpush.msra.mxu0 %v246
    %1010 = vmatpush.msra.mxu0 %v245
    %1011 = vmatpush.msra.mxu0 %v244
    %1012 = vmatpush.msra.mxu0 %v243
    %1013 = vmatmul.f32.gmra.mxu0 %v955
    %v1014 = vpop.f32.mrf.mxu0
    %v1015 = vadd.f32 0.0, %v1014
    %1016 = vdwg.mxu0
    %v1017 = vadd.f32 %v951, %v1015
    %v1018 = vxor.u32 %v1017, 2147483648
    %v1019 = vmul.f32 %v1018, 1.442695
    %v1020 = vpow.pop %v1019
    %v1021 = vadd.f32 %v1020, 1.0
    %v1022 = vrcp.pop %v1021
    %v1023 = vmul.f32 %v1021, %v1022
    %v1024 = vsub.f32 1.0, %v1023
    %v1025 = vmul.f32 %v1022, %v1024
    %v1026 = vadd.f32 %v1022, %v1025
    %vm1027 = vweird.f32 %v1021
    %vm1028 = vweird.f32 %v1022
    %vm1029 = vmor %vm1027, %vm1028
    %v1030 = vsel %vm1029, %v1022, %v1026
    %v1031 = vand.u32 2147483647, %v1021
    %vm1032 = vcmp.eq.f32.partialorder %v1031, 8.507059e+37
    %v1033 = vand.u32 %v1021, 2147483648
    %v1034 = vor.u32 1.1754944e-38, %v1033
    %v1035 = vsel %vm1032, %v1034, %v1030
    %v1036 = vmul.f32 1.0, %v1035
    %1037 = vmatpush.msra.mxu0 0.0
    %1038 = vmatpush.msra.mxu0 0.0
    %1039 = vmatpush.msra.mxu0 0.0
    %1040 = vmatpush.msra.mxu0 0.0
    %1041 = vmatpush.msra.mxu0 0.0
    %1042 = vmatpush.msra.mxu0 0.0
    %1043 = vmatpush.msra.mxu0 0.0
    %1044 = vmatpush.msra.mxu0 0.0
    %1045 = vmatpush.msra.mxu0 0.0
    %1046 = vmatpush.msra.mxu0 0.0
    %1047 = vmatpush.msra.mxu0 0.0
    %1048 = vmatpush.msra.mxu0 0.0
    %1049 = vmatpush.msra.mxu0 %v250
    %1050 = vmatpush.msra.mxu0 %v249
    %1051 = vmatpush.msra.mxu0 %v248
    %1052 = vmatpush.msra.mxu0 %v247
    %1053 = vmatmul.f32.gmra.mxu0 %v955
    %v1054 = vpop.f32.mrf.mxu0
    %v1055 = vadd.f32 %v253, %v1054
    %1056 = vdwg.mxu0
    %v1057 = vmul.f32 %v996, %v1055
    %v1058 = vadd.f32 %v953, %v1057
    %v1059 = vtanh.pop %v1058
    %v1060 = vsub.f32 1.0, %v1036
    %v1061 = vmul.f32 %v1060, %v1059
    %v1062 = vmul.f32 %v1036, %v947
    %v1063 = vadd.f32 %v1061, %v1062
    %s1064 = scalar_lea.vmem [#allocation2], 28
    %v1065 = vld [vmem:[%s1064] sm:$0xf]
    %s1066 = scalar_lea.vmem [#allocation3], 28
    %v1067 = vld [vmem:[%s1066] sm:$0xf]
    %s1068 = scalar_lea.vmem [#allocation4], 28
    %v1069 = vld [vmem:[%s1068] sm:$0xf]
    %v1071 = vsel %vm156, %v1063, 0
    %1073 = vmatpush.msra.mxu0 0.0
    %1074 = vmatpush.msra.mxu0 0.0
    %1075 = vmatpush.msra.mxu0 0.0
    %1076 = vmatpush.msra.mxu0 0.0
    %1077 = vmatpush.msra.mxu0 0.0
    %1078 = vmatpush.msra.mxu0 0.0
    %1079 = vmatpush.msra.mxu0 0.0
    %1080 = vmatpush.msra.mxu0 0.0
    %1081 = vmatpush.msra.mxu0 0.0
    %1082 = vmatpush.msra.mxu0 0.0
    %1083 = vmatpush.msra.mxu0 0.0
    %1084 = vmatpush.msra.mxu0 0.0
    %1085 = vmatpush.msra.mxu0 %v242
    %1086 = vmatpush.msra.mxu0 %v241
    %1087 = vmatpush.msra.mxu0 %v240
    %1088 = vmatpush.msra.mxu0 %v239
    %1089 = vmatmul.f32.gmra.mxu0 %v1071
    %v1090 = vpop.f32.mrf.mxu0
    %v1091 = vadd.f32 0.0, %v1090
    %1092 = vdwg.mxu0
    %v1093 = vadd.f32 %v1065, %v1091
    %v1094 = vxor.u32 %v1093, 2147483648
    %v1095 = vmul.f32 %v1094, 1.442695
    %v1096 = vpow.pop %v1095
    %v1097 = vadd.f32 %v1096, 1.0
    %v1098 = vrcp.pop %v1097
    %v1099 = vmul.f32 %v1097, %v1098
    %v1100 = vsub.f32 1.0, %v1099
    %v1101 = vmul.f32 %v1098, %v1100
    %v1102 = vadd.f32 %v1098, %v1101
    %vm1103 = vweird.f32 %v1097
    %vm1104 = vweird.f32 %v1098
    %vm1105 = vmor %vm1103, %vm1104
    %v1106 = vsel %vm1105, %v1098, %v1102
    %v1107 = vand.u32 2147483647, %v1097
    %vm1108 = vcmp.eq.f32.partialorder %v1107, 8.507059e+37
    %v1109 = vand.u32 %v1097, 2147483648
    %v1110 = vor.u32 1.1754944e-38, %v1109
    %v1111 = vsel %vm1108, %v1110, %v1106
    %v1112 = vmul.f32 1.0, %v1111
    %1113 = vmatpush.msra.mxu0 0.0
    %1114 = vmatpush.msra.mxu0 0.0
    %1115 = vmatpush.msra.mxu0 0.0
    %1116 = vmatpush.msra.mxu0 0.0
    %1117 = vmatpush.msra.mxu0 0.0
    %1118 = vmatpush.msra.mxu0 0.0
    %1119 = vmatpush.msra.mxu0 0.0
    %1120 = vmatpush.msra.mxu0 0.0
    %1121 = vmatpush.msra.mxu0 0.0
    %1122 = vmatpush.msra.mxu0 0.0
    %1123 = vmatpush.msra.mxu0 0.0
    %1124 = vmatpush.msra.mxu0 0.0
    %1125 = vmatpush.msra.mxu0 %v246
    %1126 = vmatpush.msra.mxu0 %v245
    %1127 = vmatpush.msra.mxu0 %v244
    %1128 = vmatpush.msra.mxu0 %v243
    %1129 = vmatmul.f32.gmra.mxu0 %v1071
    %v1130 = vpop.f32.mrf.mxu0
    %v1131 = vadd.f32 0.0, %v1130
    %1132 = vdwg.mxu0
    %v1133 = vadd.f32 %v1067, %v1131
    %v1134 = vxor.u32 %v1133, 2147483648
    %v1135 = vmul.f32 %v1134, 1.442695
    %v1136 = vpow.pop %v1135
    %v1137 = vadd.f32 %v1136, 1.0
    %v1138 = vrcp.pop %v1137
    %v1139 = vmul.f32 %v1137, %v1138
    %v1140 = vsub.f32 1.0, %v1139
    %v1141 = vmul.f32 %v1138, %v1140
    %v1142 = vadd.f32 %v1138, %v1141
    %vm1143 = vweird.f32 %v1137
    %vm1144 = vweird.f32 %v1138
    %vm1145 = vmor %vm1143, %vm1144
    %v1146 = vsel %vm1145, %v1138, %v1142
    %v1147 = vand.u32 2147483647, %v1137
    %vm1148 = vcmp.eq.f32.partialorder %v1147, 8.507059e+37
    %v1149 = vand.u32 %v1137, 2147483648
    %v1150 = vor.u32 1.1754944e-38, %v1149
    %v1151 = vsel %vm1148, %v1150, %v1146
    %v1152 = vmul.f32 1.0, %v1151
    %1153 = vmatpush.msra.mxu0 0.0
    %1154 = vmatpush.msra.mxu0 0.0
    %1155 = vmatpush.msra.mxu0 0.0
    %1156 = vmatpush.msra.mxu0 0.0
    %1157 = vmatpush.msra.mxu0 0.0
    %1158 = vmatpush.msra.mxu0 0.0
    %1159 = vmatpush.msra.mxu0 0.0
    %1160 = vmatpush.msra.mxu0 0.0
    %1161 = vmatpush.msra.mxu0 0.0
    %1162 = vmatpush.msra.mxu0 0.0
    %1163 = vmatpush.msra.mxu0 0.0
    %1164 = vmatpush.msra.mxu0 0.0
    %1165 = vmatpush.msra.mxu0 %v250
    %1166 = vmatpush.msra.mxu0 %v249
    %1167 = vmatpush.msra.mxu0 %v248
    %1168 = vmatpush.msra.mxu0 %v247
    %1169 = vmatmul.f32.gmra.mxu0 %v1071
    %v1170 = vpop.f32.mrf.mxu0
    %v1171 = vadd.f32 %v253, %v1170
    %1172 = vdwg.mxu0
    %v1173 = vmul.f32 %v1112, %v1171
    %v1174 = vadd.f32 %v1069, %v1173
    %v1175 = vtanh.pop %v1174
    %v1176 = vsub.f32 1.0, %v1152
    %v1177 = vmul.f32 %v1176, %v1175
    %v1178 = vmul.f32 %v1152, %v1063
    %v1179 = vadd.f32 %v1177, %v1178
    %v1180 = vld [vmem:[%s11] sm:$0xff]
    %v1181 = vld [vmem:[%s11 + $0x8] sm:$0xff]
    %v1182 = vld [vmem:[%s11 + $0x10] sm:$0xff]
    %v1183 = vld [vmem:[%s11 + $0x18] sm:$0xff]
    %v1184 = vld [vmem:[%s12] sm:$0xff]
    %v1185 = vld [vmem:[%s12 + $0x8] sm:$0xff]
    %v1186 = vld [vmem:[%s12 + $0x10] sm:$0xff]
    %v1187 = vld [vmem:[%s12 + $0x18] sm:$0xff]
    %v1189 = vrot.slane %v1179, 2
    %v1190 = vsel %vm156, %v1189, 0
    %1192 = vmatpush.msra.mxu0 0.0
    %1193 = vmatpush.msra.mxu0 0.0
    %1194 = vmatpush.msra.mxu0 0.0
    %1195 = vmatpush.msra.mxu0 0.0
    %1196 = vmatpush.msra.mxu0 0.0
    %1197 = vmatpush.msra.mxu0 0.0
    %1198 = vmatpush.msra.mxu0 0.0
    %1199 = vmatpush.msra.mxu0 0.0
    %1200 = vmatpush.msra.mxu0 0.0
    %1201 = vmatpush.msra.mxu0 0.0
    %1202 = vmatpush.msra.mxu0 0.0
    %1203 = vmatpush.msra.mxu0 0.0
    %1204 = vmatpush.msra.mxu0 %v1187
    %1205 = vmatpush.msra.mxu0 %v1186
    %1206 = vmatpush.msra.mxu0 %v1185
    %1207 = vmatpush.msra.mxu0 %v1184
    %1208 = vmatmul.f32.gmra.mxu0 %v1190
    %v1209 = vpop.f32.mrf.mxu0
    %v1210 = vadd.f32 0.0, %v1209
    %1211 = vdwg.mxu0
    %v1212 = vsel %vm156, %v1179, 0
    %1214 = vmatpush.msra.mxu0 0.0
    %1215 = vmatpush.msra.mxu0 0.0
    %1216 = vmatpush.msra.mxu0 0.0
    %1217 = vmatpush.msra.mxu0 0.0
    %1218 = vmatpush.msra.mxu0 0.0
    %1219 = vmatpush.msra.mxu0 0.0
    %1220 = vmatpush.msra.mxu0 0.0
    %1221 = vmatpush.msra.mxu0 0.0
    %1222 = vmatpush.msra.mxu0 0.0
    %1223 = vmatpush.msra.mxu0 0.0
    %1224 = vmatpush.msra.mxu0 0.0
    %1225 = vmatpush.msra.mxu0 0.0
    %1226 = vmatpush.msra.mxu0 %v1183
    %1227 = vmatpush.msra.mxu0 %v1182
    %1228 = vmatpush.msra.mxu0 %v1181
    %1229 = vmatpush.msra.mxu0 %v1180
    %1230 = vmatmul.f32.gmra.mxu0 %v1212
    %v1231 = vpop.f32.mrf.mxu0
    %v1232 = vadd.f32 %v1210, %v1231
    %1233 = vdwg.mxu0
    %v1234 = vld [vmem:[%s13] sm:$0x1]
    %v1236 = vperm.slane %v1234, 0
    %v1238 = vadd.f32 %v1232, %v1236
    %s1239 = sld [smem:[#allocation13]]
    %v1240 = vld [vmem:[%s0 + $0x10] sm:$0x3]
    %v1241 = vstv %s1239
    %v1242 = vmul.f32 %v1241, %v1240
    %v1243 = vadd.f32 %v1242, 0.0
    %s1244 = sld [smem:[#allocation13 + $0x1]]
    %v1245 = vld [vmem:[%s0 + $0x14] sm:$0x3]
    %v1246 = vstv %s1244
    %v1247 = vmul.f32 %v1246, %v1245
    %v1248 = vadd.f32 %v1243, %v1247
    %s1249 = sld [smem:[#allocation13 + $0x2]]
    %v1250 = vld [vmem:[%s0 + $0x18] sm:$0x3]
    %v1251 = vstv %s1249
    %v1252 = vmul.f32 %v1251, %v1250
    %v1253 = vadd.f32 %v1248, %v1252
    %s1254 = sld [smem:[#allocation13 + $0x3]]
    %v1255 = vld [vmem:[%s0 + $0x1c] sm:$0x3]
    %v1256 = vstv %s1254
    %v1257 = vmul.f32 %v1256, %v1255
    %v1258 = vadd.f32 %v1253, %v1257
    %s1259 = sld [smem:[#allocation5]]
    %v1260 = vstv %s1259
    %v1261 = vadd.f32 %v1258, %v1260
    %s1262 = sld [smem:[#allocation6]]
    %v1263 = vstv %s1262
    %v1264 = vmul.f32 %v1238, %v1263
    %v1265 = vadd.f32 %v1264, %v1261
    %v1266 = vxor.u32 %v1265, 2147483648
    %v1267 = vmul.f32 %v1266, 1.442695
    %v1268 = vpow.pop %v1267
    %v1269 = vadd.f32 %v1268, 1.0
    %v1270 = vrcp.pop %v1269
    %v1271 = vmul.f32 %v1269, %v1270
    %v1272 = vsub.f32 1.0, %v1271
    %v1273 = vmul.f32 %v1270, %v1272
    %v1274 = vadd.f32 %v1270, %v1273
    %vm1275 = vweird.f32 %v1269
    %vm1276 = vweird.f32 %v1270
    %vm1277 = vmor %vm1275, %vm1276
    %v1278 = vsel %vm1277, %v1270, %v1274
    %v1279 = vand.u32 2147483647, %v1269
    %vm1280 = vcmp.eq.f32.partialorder %v1279, 8.507059e+37
    %v1281 = vand.u32 %v1269, 2147483648
    %v1282 = vor.u32 1.1754944e-38, %v1281
    %v1283 = vsel %vm1280, %v1282, %v1278
    %v1284 = vmul.f32 1.0, %v1283
    %vm1285 = vcmask 123904
    %1286 = vst.msk [vmem:[#allocation14] sm:$0x3] %vm1285, %v1284
    // Predicated region
    $region82: #{tpu_custom_call.1} parent=1 // pred_check
      _
    $region83: #{tpu_custom_call.1} parent=1 // pred_check_branch
      %1288 = sbr.rel (0) target = $region85
    $region84: #{tpu_custom_call.1} parent=1 // pred_region
      %1290 = vsyncadd [#allocation9], 0
      %s1292 = sshll.u32 [#allocation14], 4
      %s1293 = int_to_ptr.vmem [resolvable:$true] %s1292
      %s1294 = sshll.u32 %s17, 4
      %s1295 = int_to_ptr.hbm [resolvable:$true] %s1294
      %1297 = dma.vmem_to_hbm [thread:$0]  %s1293, 32, %s1295, [#allocation9]
    $region85: #{tpu_custom_call.1} parent=1 // pred_fallthru
      _
    // Predicated region
    $region86: #{tpu_custom_call.1} parent=1 // pred_check
      _
    $region87: #{tpu_custom_call.1} parent=1 // pred_check_branch
      %1299 = sbr.rel (0) target = $region89
    $region88: #{tpu_custom_call.1} parent=1 // pred_region
      %1301 = dma.done [#allocation9], 32
    $region89: #{tpu_custom_call.1} parent=1 // pred_fallthru
      _
    %1302 = vsyncpa [#allocation8], 1
    %1303 = vsyncpa [#allocation12], 1
    %1304 = vsyncpa [#allocation9], 1
    %1305 = vsyncpa [#allocation10], 1

</llo_original>
